<compile_context>
chip_gen: v5e
topology: v5e:2x2
jax: 0.10.0
libtpu: 0.0.40
codegen_flags: <defaults>
</compile_context>

<pallas_src>
import numpy as np
import jax
import jax.numpy as jnp
from jax import lax
from jax.experimental import pallas as pl
from jax.experimental.pallas import tpu as pltpu

EPS = 1e-5
KSZ = 4                       # every DCGAN (de)conv uses a 4x4 kernel
LANE = 128
CSUB = 16                     # bf16 packed sublane tile -> pad C_out to 16
MAX_TM = 1024                 # lane (M) tile ceiling
MAX_TK = 2048                 # full-K single tile for all DCGAN layer sizes
VMEM_LIMIT = 32 * 1024 * 1024


# ----------------------------------------------------------------- small utils
def _round_up(x, m):
    return ((x + m - 1) // m) * m


def _pad_axis(a, axis, target):
    if a.shape[axis] == target:
        return a
    pads = [(0, 0)] * a.ndim
    pads[axis] = (0, target - a.shape[axis])
    return jnp.pad(a, pads)


def _pick_m_tile(m):
    """Lane-dense M tile: multiple of 128, <= MAX_TM, divides the lane-padded
    extent (no padding waste), and gives >=2 m-tiles when possible so both
    v7x TensorCores get work (one TC per grid point otherwise)."""
    m_lane = _round_up(max(m, 1), LANE)
    best = None
    t = LANE
    while t <= min(MAX_TM, m_lane):
        if m_lane % t == 0:
            if m_lane // t >= 2:
                best = t
            elif best is None:
                best = t
        t += LANE
    tm = best if best is not None else LANE
    return tm, _round_up(m_lane, tm)


# ---------------------------------------------------------------- Pallas kernels
def _make_gemm_stats_kernel(n_blk, c_pp):
    """Tiled GEMM (bf16 in, f32 acc, bf16 out) + masked per-tile BN partials.

    grid = (m_tiles, k_tiles), K (reduction) innermost / "arbitrary".
    Blocks: w (c_stack, TK), p (TK, TM), mask (8, TM),
            y (c_stack, TM) bf16, s1/s2 (1, n_blk, c_pp, 1) f32,
            acc scratch (c_stack, TM) f32 with c_stack = n_blk * c_pp.
    """
    def kernel(w_ref, p_ref, mask_ref, y_ref, s1_ref, s2_ref, acc_ref):
        k = pl.program_id(1)

        @pl.when(k == 0)
        def _init():
            acc_ref[...] = jnp.zeros_like(acc_ref)

        acc_ref[...] += jnp.dot(w_ref[...], p_ref[...],
                                preferred_element_type=jnp.float32)

        @pl.when(k == pl.num_programs(1) - 1)
        def _finalize():
            acc = acc_ref[...]
            y_ref[...] = acc.astype(y_ref.dtype)
            mall = mask_ref[...]                      # (8, TM) 0/1 validity
            for b in range(n_blk):
                blk = acc[b * c_pp:(b + 1) * c_pp, :]
                bm = blk * mall[b:b + 1, :]
                s1_ref[0, b] = jnp.sum(bm, axis=1, keepdims=True)
                s2_ref[0, b] = jnp.sum(bm * blk, axis=1, keepdims=True)

    return kernel


def _gemm_tanh_kernel(w_ref, p_ref, o_ref, acc_ref):
    """Tiled GEMM with tanh fused into the finalize step (final layer)."""
    k = pl.program_id(1)

    @pl.when(k == 0)
    def _init():
        acc_ref[...] = jnp.zeros_like(acc_ref)

    acc_ref[...] += jnp.dot(w_ref[...], p_ref[...],
                            preferred_element_type=jnp.float32)

    @pl.when(k == pl.num_programs(1) - 1)
    def _finalize():
        o_ref[...] = jnp.tanh(acc_ref[...]).astype(o_ref.dtype)


def _bn_relu_kernel(y_ref, sc_ref, sh_ref, o_ref):
    """Per-row scale/shift (folded BN) + ReLU on the bf16 GEMM output."""
    y = y_ref[...].astype(jnp.float32)
    o_ref[...] = jnp.maximum(y * sc_ref[...] + sh_ref[...], 0.0
                             ).astype(o_ref.dtype)


# --------------------------------------------------------------- Pallas wrappers
def pallas_gemm_stats(w_st, pmat, mask, n_blk, c_pp, tm):
    """w_st: (c_stack, K_pad) bf16, pmat: (K_pad, M_pad) bf16, mask: (8, M_pad).
    Returns (Y bf16 (c_stack, M_pad), s1, s2) with s1/s2 (m_tiles, n_blk, c_pp, 1)."""
    c_stack, k_pad = w_st.shape
    m_pad = pmat.shape[1]
    tk = min(MAX_TK, k_pad)
    m_tiles, k_tiles = m_pad // tm, k_pad // tk
    return pl.pallas_call(
        _make_gemm_stats_kernel(n_blk, c_pp),
        out_shape=(jax.ShapeDtypeStruct((c_stack, m_pad), jnp.bfloat16),
                   jax.ShapeDtypeStruct((m_tiles, n_blk, c_pp, 1), jnp.float32),
                   jax.ShapeDtypeStruct((m_tiles, n_blk, c_pp, 1), jnp.float32)),
        grid_spec=pltpu.PrefetchScalarGridSpec(
            num_scalar_prefetch=0,
            grid=(m_tiles, k_tiles),
            in_specs=[pl.BlockSpec((c_stack, tk), lambda m, k: (0, k)),
                      pl.BlockSpec((tk, tm), lambda m, k: (k, m)),
                      pl.BlockSpec((8, tm), lambda m, k: (0, m))],
            out_specs=[pl.BlockSpec((c_stack, tm), lambda m, k: (0, m)),
                       pl.BlockSpec((1, n_blk, c_pp, 1),
                                    lambda m, k: (m, 0, 0, 0)),
                       pl.BlockSpec((1, n_blk, c_pp, 1),
                                    lambda m, k: (m, 0, 0, 0))],
            scratch_shapes=[pltpu.VMEM((c_stack, tm), jnp.float32)]),
        compiler_params=pltpu.CompilerParams(
            dimension_semantics=("parallel", "arbitrary"),
            vmem_limit_bytes=VMEM_LIMIT),
    )(w_st, pmat, mask)


def pallas_gemm_tanh(w_st, pmat, tm):
    c_stack, k_pad = w_st.shape
    m_pad = pmat.shape[1]
    tk = min(MAX_TK, k_pad)
    m_tiles, k_tiles = m_pad // tm, k_pad // tk
    return pl.pallas_call(
        _gemm_tanh_kernel,
        out_shape=jax.ShapeDtypeStruct((c_stack, m_pad), jnp.float32),
        grid_spec=pltpu.PrefetchScalarGridSpec(
            num_scalar_prefetch=0,
            grid=(m_tiles, k_tiles),
            in_specs=[pl.BlockSpec((c_stack, tk), lambda m, k: (0, k)),
                      pl.BlockSpec((tk, tm), lambda m, k: (k, m))],
            out_specs=pl.BlockSpec((c_stack, tm), lambda m, k: (0, m)),
            scratch_shapes=[pltpu.VMEM((c_stack, tm), jnp.float32)]),
        compiler_params=pltpu.CompilerParams(
            dimension_semantics=("parallel", "arbitrary"),
            vmem_limit_bytes=VMEM_LIMIT),
    )(w_st, pmat)


def pallas_bn_relu(y, scale_rows, shift_rows, tm):
    """y: (c_stack, M_pad) bf16; scale/shift: (c_stack, 1) f32 -> bf16 act."""
    c_stack, m_pad = y.shape
    m_tiles = m_pad // tm
    return pl.pallas_call(
        _bn_relu_kernel,
        out_shape=jax.ShapeDtypeStruct((c_stack, m_pad), jnp.bfloat16),
        grid=(m_tiles,),
        in_specs=[pl.BlockSpec((c_stack, tm), lambda m: (0, m)),
                  pl.BlockSpec((c_stack, 1), lambda m: (0, 0)),
                  pl.BlockSpec((c_stack, 1), lambda m: (0, 0))],
        out_specs=pl.BlockSpec((c_stack, tm), lambda m: (0, m)),
        compiler_params=pltpu.CompilerParams(
            dimension_semantics=("parallel",),
            vmem_limit_bytes=VMEM_LIMIT),
    )(y, scale_rows, shift_rows)


# ------------------------------------------------------------------- glue (JAX)
def _prep_stride1(x_cm, w_t):
    """ConvTranspose2d(4, stride=1, pad=0) as a stride-1 conv GEMM.
    x_cm channel-major (C_in, N, H, W); w_t (C_in, C_out, 4, 4)."""
    c, n, h, w = x_cm.shape
    c_out = w_t.shape[1]
    pad = KSZ - 1
    xp = jnp.pad(x_cm, ((0, 0), (0, 0), (pad, pad), (pad, pad)))
    ho, wo = h + pad, w + pad
    cols = [xp[:, :, ky:ky + ho, kx:kx + wo]
            for ky in range(KSZ) for kx in range(KSZ)]
    pmat = jnp.stack(cols, axis=1).reshape(c * KSZ * KSZ, n * ho * wo)
    w_conv = jnp.flip(w_t, axis=(2, 3)).transpose(1, 0, 2, 3)   # (C_out, C_in, 4, 4)
    w_blocks = w_conv.reshape(1, c_out, c * KSZ * KSZ)
    mask = jnp.ones((1, n * ho * wo), jnp.float32)
    return w_blocks, pmat, mask, (ho, wo)


def _prep_stride2(x_cm, w_t):
    """ConvTranspose2d(4, stride=2, pad=1): all 4 output phases share one
    2x2-window patch matrix over the symmetrically 1-padded input; the 4
    per-phase 2x2 sub-kernels are stacked along the output rows.
    Phase ph=(py,px): out[:,:,2t+py,2u+px] = Z[ph, :, :, t+py, u+px] where Z is
    the GEMM output reshaped to (4, C, N, H+1, W+1)."""
    c, n, h, w = x_cm.shape
    c_out = w_t.shape[1]
    xp = jnp.pad(x_cm, ((0, 0), (0, 0), (1, 1), (1, 1)))
    hp, wp = h + 1, w + 1                             # window-position extents
    cols = [xp[:, :, dy:dy + hp, dx:dx + wp] for dy in (0, 1) for dx in (0, 1)]
    pmat = jnp.stack(cols, axis=1).reshape(c * 4, n * hp * wp)

    w_blocks, masks = [], []
    for ph in range(4):
        py, px = ph // 2, ph % 2
        taps = [w_t[:, :, 3 - py - 2 * dy, 3 - px - 2 * dx]
                for dy in (0, 1) for dx in (0, 1)]    # each (C_in, C_out)
        sub = jnp.stack(taps, axis=1)                 # (C_in, 4, C_out)
        w_blocks.append(sub.transpose(2, 0, 1).reshape(c_out, c * 4))
        # validity of window position (s, v) for this phase (excludes the slop)
        vy = (np.arange(hp) != (h if py == 0 else 0)).astype(np.float32)
        vx = (np.arange(wp) != (w if px == 0 else 0)).astype(np.float32)
        m2d = vy[:, None] * vx[None, :]
        masks.append(np.tile(m2d[None], (n, 1, 1)).reshape(-1))
    w_blocks = jnp.stack(w_blocks, 0)                 # (4, C_out, C_in*4)
    mask = jnp.asarray(np.stack(masks, 0))            # (4, N*hp*wp)
    return w_blocks, pmat, mask, (hp, wp)


def _prep_gemm(x_cm, w_t, stride):
    x_cm = x_cm.astype(jnp.bfloat16)
    w_t = w_t.astype(jnp.bfloat16)
    if stride == 1:
        w_blocks, pmat, mask, sp = _prep_stride1(x_cm, w_t)
    else:
        w_blocks, pmat, mask, sp = _prep_stride2(x_cm, w_t)
    n_blk, c_out, kdim = w_blocks.shape
    m_true = pmat.shape[1]
    c_pp = _round_up(c_out, CSUB)
    k_pad = _round_up(kdim, LANE)
    tk = min(MAX_TK, k_pad)
    k_pad = _round_up(k_pad, tk)
    tm, m_pad = _pick_m_tile(m_true)
    w_st = _pad_axis(_pad_axis(w_blocks, 1, c_pp), 2, k_pad)
    w_st = w_st.reshape(n_blk * c_pp, k_pad)
    pmat = _pad_axis(_pad_axis(pmat, 0, k_pad), 1, m_pad)
    mask = _pad_axis(_pad_axis(mask.astype(jnp.float32), 0, 8), 1, m_pad)
    return dict(w_st=w_st, pmat=pmat, mask=mask, n_blk=n_blk, c_out=c_out,
                c_pp=c_pp, m_true=m_true, tm=tm, sp=sp)


def _assemble(z, g, n, h_in, w_in, stride):
    """GEMM output (c_stack, M_pad) -> channel-major (C_out, N, H_out, W_out)."""
    c_out, c_pp, n_blk, m_true = g["c_out"], g["c_pp"], g["n_blk"], g["m_true"]
    z = z[:, :m_true]
    if stride == 1:
        ho, wo = g["sp"]
        return z[:c_out].reshape(c_out, n, ho, wo)
    hp, wp = g["sp"]
    z = z.reshape(n_blk, c_pp, n, hp, wp)[:, :c_out]
    parts = []
    for ph in range(4):
        py, px = ph // 2, ph % 2
        parts.append(z[ph, :, :, py:py + h_in, px:px + w_in])
    y = jnp.stack(parts, 0).reshape(2, 2, c_out, n, h_in, w_in)
    y = y.transpose(2, 3, 4, 0, 5, 1).reshape(c_out, n, 2 * h_in, 2 * w_in)
    return y


def conv_transpose_bn_relu(x_cm, w_t, gamma, beta, stride):
    """ConvTranspose2d(4, stride, bias=False) + BatchNorm2d(batch stats) + ReLU.
    x_cm / result are channel-major (C, N, H, W)."""
    n, h_in, w_in = x_cm.shape[1], x_cm.shape[2], x_cm.shape[3]
    g = _prep_gemm(x_cm, w_t, stride)

    y, s1, s2 = pallas_gemm_stats(g["w_st"], g["pmat"], g["mask"],
                                  g["n_blk"], g["c_pp"], g["tm"])

    if stride == 1:
        ho, wo = g["sp"]
    else:
        ho, wo = 2 * h_in, 2 * w_in
    count = jnp.float32(n * ho * wo)                   # true N * H_out * W_out
    ssum = s1.sum(axis=0)[:, :g["c_out"]].sum(axis=0)  # (C_out, 1)
    ssq = s2.sum(axis=0)[:, :g["c_out"]].sum(axis=0)
    mean = ssum / count
    # NOTE: E[x^2]-E[x]^2 in f32 is adequate at these activation scales.
    var = jnp.maximum(ssq / count - mean * mean, 0.0)
    inv = lax.rsqrt(var + EPS)
    scale = gamma * inv                                # (C_out, 1)
    shift = beta - mean * scale
    scale_rows = jnp.tile(_pad_axis(scale, 0, g["c_pp"]), (g["n_blk"], 1))
    shift_rows = jnp.tile(_pad_axis(shift, 0, g["c_pp"]), (g["n_blk"], 1))

    act = pallas_bn_relu(y, scale_rows.astype(jnp.float32),
                         shift_rows.astype(jnp.float32), g["tm"])
    return _assemble(act, g, n, h_in, w_in, stride)


def conv_transpose_tanh(x_cm, w_t, stride):
    """Final ConvTranspose2d(4, stride, bias=False) + Tanh, fused in one kernel."""
    n, h_in, w_in = x_cm.shape[1], x_cm.shape[2], x_cm.shape[3]
    g = _prep_gemm(x_cm, w_t, stride)
    y = pallas_gemm_tanh(g["w_st"], g["pmat"], g["tm"])
    return _assemble(y, g, n, h_in, w_in, stride)


# --------------------------------------------------------------- model assembly
def reversed_feature_multiplies(img_size):
    num_up = int(round(np.log2(img_size))) - 3
    return [2 ** (num_up - i) for i in range(num_up)]


def init_generator_params(key, img_size, nz, ngf, nc):
    mult = reversed_feature_multiplies(img_size)
    params = []

    # DCGAN weights_init: conv ~ N(0, 0.02); BN weight ~ N(1, 0.02); BN bias = 0.
    def conv_w(k, cin, cout):
        return 0.02 * jax.random.normal(k, (cin, cout, KSZ, KSZ), jnp.float32)

    def bn(k, c):
        g = 1.0 + 0.02 * jax.random.normal(k, (c, 1), jnp.float32)
        return g, jnp.zeros((c, 1), jnp.float32)

    keys = iter(jax.random.split(key, 2 * (len(mult) + 2)))
    c0 = ngf * mult[0]
    g0, b0 = bn(next(keys), c0)
    params.append(dict(w=conv_w(next(keys), nz, c0), gamma=g0, beta=b0,
                       stride=1, padding=0, final=False))
    for m in mult:
        cin, cout = ngf * m, ngf * m // 2
        g, b = bn(next(keys), cout)
        params.append(dict(w=conv_w(next(keys), cin, cout), gamma=g, beta=b,
                           stride=2, padding=1, final=False))
    params.append(dict(w=conv_w(next(keys), ngf, nc), gamma=None, beta=None,
                       stride=2, padding=1, final=True))
    return params


def generator_forward(params, z):
    x = z.transpose(1, 0, 2, 3)                 # NCHW -> channel-major (C,N,H,W)
    for p in params:
        if p["final"]:
            x = conv_transpose_tanh(x, p["w"], p["stride"])
        else:
            x = conv_transpose_bn_relu(x, p["w"], p["gamma"], p["beta"],
                                       p["stride"])
    return x.transpose(1, 0, 2, 3).astype(jnp.float32)   # back to NCHW


# ------------------------------------------------------------- pure-JAX reference
def _ref_conv_transpose(x, w_t, stride, padding):
    # Same bf16-input / f32-accumulation policy as the Pallas kernels.
    xb = x.astype(jnp.bfloat16).astype(jnp.float32)
    wb = w_t.astype(jnp.bfloat16).astype(jnp.float32)
    wf = jnp.flip(wb, axis=(2, 3)).transpose(1, 0, 2, 3)   # (C_out, C_in, 4, 4)
    pad = KSZ - 1 - padding
    return lax.conv_general_dilated(
        xb, wf, window_strides=(1, 1), padding=[(pad, pad), (pad, pad)],
        lhs_dilation=(stride, stride),
        dimension_numbers=("NCHW", "OIHW", "NCHW"),
        preferred_element_type=jnp.float32)


def reference_forward(params, z):
    x = z
    for p in params:
        y = _ref_conv_transpose(x, p["w"], p["stride"], p["padding"])
        if p["final"]:
            x = jnp.tanh(y)
        else:
            mean = y.mean(axis=(0, 2, 3), keepdims=True)
            var = ((y - mean) ** 2).mean(axis=(0, 2, 3), keepdims=True)
            inv = lax.rsqrt(var + EPS)
            g = p["gamma"][:, 0].reshape(1, -1, 1, 1)
            b = p["beta"][:, 0].reshape(1, -1, 1, 1)
            scale = g * inv
            shift = b - mean * scale
            yq = y.astype(jnp.bfloat16).astype(jnp.float32)   # mirror bf16 Y
            x = jnp.maximum(yq * scale + shift, 0.0).astype(jnp.bfloat16)
    return x.astype(jnp.float32)


# ------------------------------------------------------------------------- main
def _run_and_check(img_size, nz, ngf, nc, batch, seed=0):
    key = jax.random.PRNGKey(seed)
    k_params, k_input = jax.random.split(key)
    params = init_generator_params(k_params, img_size, nz, ngf, nc)
    z = jax.random.normal(k_input, (batch, nz, 1, 1), jnp.float32)

    fwd = jax.jit(lambda zz: generator_forward(params, zz))
    out = jax.block_until_ready(fwd(z))
    ref = jax.block_until_ready(reference_forward(params, z))

    assert out.shape == (batch, nc, img_size, img_size), out.shape
    assert bool(jnp.all(jnp.isfinite(out)))
    # Tolerance reflects the bf16-input / f32-accumulation mixed-precision policy.
    np.testing.assert_allclose(np.asarray(out), np.asarray(ref),
                               rtol=2e-2, atol=2e-2)


if __name__ == "__main__":
    # Small configs: exercises the stride-1 head, the stride-2 phase stacking,
    # the slop masking and the phase interleave at two scales.
    _run_and_check(img_size=16, nz=8, ngf=8, nc=3, batch=2)
    _run_and_check(img_size=32, nz=8, ngf=8, nc=3, batch=2)
    print("KERNEL_OK")
</pallas_src>

<mosaic_0001>
module attributes {stable_mosaic.version = 11 : i64} {
  func.func @kernel(%arg0: i32, %arg1: i32, %arg2: memref<16x128xbf16, #tpu.memory_space<vmem>>, %arg3: memref<128x128xbf16, #tpu.memory_space<vmem>>, %arg4: memref<8x128xf32, #tpu.memory_space<vmem>>, %arg5: memref<16x128xbf16, #tpu.memory_space<vmem>>, %arg6: memref<1x1x16x1xf32, #tpu.memory_space<vmem>>, %arg7: memref<1x1x16x1xf32, #tpu.memory_space<vmem>>, %arg8: memref<16x128xf32, #tpu.memory_space<vmem>>) attributes {dimension_semantics = [#tpu.dimension_semantics<parallel>, #tpu.dimension_semantics<arbitrary>], iteration_bounds = array<i64: 1, 1>, scalar_prefetch = 0 : i64, scratch_operands = 1 : i64, tpu.core_type = #tpu.core_type<tc>, window_params = [{transform_indices = @transform_0, window_bounds = array<i64: 16, 128>}, {transform_indices = @transform_1, window_bounds = array<i64: 128, 128>}, {transform_indices = @transform_2, window_bounds = array<i64: 8, 128>}, {transform_indices = @transform_3, window_bounds = array<i64: 16, 128>}, {transform_indices = @transform_4, window_bounds = array<i64: 1, 1, 16, 1>}, {transform_indices = @transform_5, window_bounds = array<i64: 1, 1, 16, 1>}]} {
    %c0_i32 = arith.constant 0 : i32
    %0 = arith.cmpi eq, %arg1, %c0_i32 : i32
    %1 = arith.extui %0 : i1 to i32
    %c0_i32_0 = arith.constant 0 : i32
    %2 = arith.cmpi ne, %1, %c0_i32_0 : i32
    scf.if %2 {
      %cst_10 = arith.constant 0.000000e+00 : f32
      %12 = vector.broadcast %cst_10 : f32 to vector<16x128xf32>
      %c0_11 = arith.constant 0 : index
      %c0_12 = arith.constant 0 : index
      %13 = vector.load %arg8[%c0_11, %c0_12] : memref<16x128xf32, #tpu.memory_space<vmem>>, vector<16x128xf32>
      tpu.vector_store %arg8[%c0_11, %c0_12], %12 {strides = array<i32>} : memref<16x128xf32, #tpu.memory_space<vmem>>, vector<16x128xf32>,
    } else {
    }
    %c0 = arith.constant 0 : index
    %c0_1 = arith.constant 0 : index
    %3 = vector.load %arg8[%c0, %c0_1] : memref<16x128xf32, #tpu.memory_space<vmem>>, vector<16x128xf32>
    %c0_2 = arith.constant 0 : index
    %c0_3 = arith.constant 0 : index
    %4 = vector.load %arg2[%c0_2, %c0_3] : memref<16x128xbf16, #tpu.memory_space<vmem>>, vector<16x128xbf16>
    %c0_4 = arith.constant 0 : index
    %c0_5 = arith.constant 0 : index
    %5 = vector.load %arg3[%c0_4, %c0_5] : memref<128x128xbf16, #tpu.memory_space<vmem>>, vector<128x128xbf16>
    %cst = arith.constant dense<0.000000e+00> : vector<16x128xf32>
    %6 = tpu.matmul %4, %5, %cst {dimension_numbers = #tpu.dot_dimension_numbers<[1], [0], [0], [1], [0, 0, 1, 1], [], []>} : vector<16x128xbf16>, vector<128x128xbf16>, vector<16x128xf32> -> vector<16x128xf32>
    %7 = arith.addf %3, %6 : vector<16x128xf32>
    %c0_6 = arith.constant 0 : index
    %c0_7 = arith.constant 0 : index
    %8 = vector.load %arg8[%c0_6, %c0_7] : memref<16x128xf32, #tpu.memory_space<vmem>>, vector<16x128xf32>
    tpu.vector_store %arg8[%c0_6, %c0_7], %7 {strides = array<i32>} : memref<16x128xf32, #tpu.memory_space<vmem>>, vector<16x128xf32>,
    %c0_i32_8 = arith.constant 0 : i32
    %9 = arith.cmpi eq, %arg1, %c0_i32_8 : i32
    %10 = arith.extui %9 : i1 to i32
    %c0_i32_9 = arith.constant 0 : i32
    %11 = arith.cmpi ne, %10, %c0_i32_9 : i32
    scf.if %11 {
      %c0_10 = arith.constant 0 : index
      %c0_11 = arith.constant 0 : index
      %12 = vector.load %arg8[%c0_10, %c0_11] : memref<16x128xf32, #tpu.memory_space<vmem>>, vector<16x128xf32>
      %13 = arith.truncf %12 : vector<16x128xf32> to vector<16x128xbf16>
      %c0_12 = arith.constant 0 : index
      %c0_13 = arith.constant 0 : index
      %14 = vector.load %arg5[%c0_12, %c0_13] : memref<16x128xbf16, #tpu.memory_space<vmem>>, vector<16x128xbf16>
      tpu.vector_store %arg5[%c0_12, %c0_13], %13 {strides = array<i32>} : memref<16x128xbf16, #tpu.memory_space<vmem>>, vector<16x128xbf16>,
      %c0_14 = arith.constant 0 : index
      %c0_15 = arith.constant 0 : index
      %15 = vector.load %arg4[%c0_14, %c0_15] : memref<8x128xf32, #tpu.memory_space<vmem>>, vector<8x128xf32>
      %16 = vector.extract_strided_slice %15 {offsets = [0, 0], sizes = [1, 128], strides = [1, 1]} : vector<8x128xf32> to vector<1x128xf32>
      %17 = vector.broadcast %16 : vector<1x128xf32> to vector<16x128xf32>
      %18 = arith.mulf %12, %17 : vector<16x128xf32>
      %cst_16 = arith.constant dense<0.000000e+00> : vector<16xf32>
      %19 = vector.multi_reduction <add>, %18, %cst_16 [1] : vector<16x128xf32> to vector<16xf32>
      %20 = vector.shape_cast %19 : vector<16xf32> to vector<16x1xf32>
      %c0_17 = arith.constant 0 : index
      %c0_18 = arith.constant 0 : index
      %c0_19 = arith.constant 0 : index
      %c0_20 = arith.constant 0 : index
      %21 = vector.load %arg6[%c0_17, %c0_18, %c0_19, %c0_20] : memref<1x1x16x1xf32, #tpu.memory_space<vmem>>, vector<1x1x16x1xf32>
      %22 = vector.shape_cast %21 : vector<1x1x16x1xf32> to vector<16x1xf32>
      %23 = vector.shape_cast %20 : vector<16x1xf32> to vector<1x1x16x1xf32>
      tpu.vector_store %arg6[%c0_17, %c0_18, %c0_19, %c0_20], %23 {strides = array<i32>} : memref<1x1x16x1xf32, #tpu.memory_space<vmem>>, vector<1x1x16x1xf32>,
      %24 = arith.mulf %18, %12 : vector<16x128xf32>
      %cst_21 = arith.constant dense<0.000000e+00> : vector<16xf32>
      %25 = vector.multi_reduction <add>, %24, %cst_21 [1] : vector<16x128xf32> to vector<16xf32>
      %26 = vector.shape_cast %25 : vector<16xf32> to vector<16x1xf32>
      %c0_22 = arith.constant 0 : index
      %c0_23 = arith.constant 0 : index
      %c0_24 = arith.constant 0 : index
      %c0_25 = arith.constant 0 : index
      %27 = vector.load %arg7[%c0_22, %c0_23, %c0_24, %c0_25] : memref<1x1x16x1xf32, #tpu.memory_space<vmem>>, vector<1x1x16x1xf32>
      %28 = vector.shape_cast %27 : vector<1x1x16x1xf32> to vector<16x1xf32>
      %29 = vector.shape_cast %26 : vector<16x1xf32> to vector<1x1x16x1xf32>
      tpu.vector_store %arg7[%c0_22, %c0_23, %c0_24, %c0_25], %29 {strides = array<i32>} : memref<1x1x16x1xf32, #tpu.memory_space<vmem>>, vector<1x1x16x1xf32>,
    } else {
    }
    return
  }
  func.func @transform_0(%arg0: i32, %arg1: i32) -> (i32, i32) {
    %c0_i32 = arith.constant 0 : i32
    %c0_i32_0 = arith.constant 0 : i32
    return %c0_i32, %arg1 : i32, i32
  }
  func.func @transform_1(%arg0: i32, %arg1: i32) -> (i32, i32) {
    %c0_i32 = arith.constant 0 : i32
    return %arg1, %arg0 : i32, i32
  }
  func.func @transform_2(%arg0: i32, %arg1: i32) -> (i32, i32) {
    %c0_i32 = arith.constant 0 : i32
    %c0_i32_0 = arith.constant 0 : i32
    return %c0_i32, %arg0 : i32, i32
  }
  func.func @transform_3(%arg0: i32, %arg1: i32) -> (i32, i32) {
    %c0_i32 = arith.constant 0 : i32
    %c0_i32_0 = arith.constant 0 : i32
    return %c0_i32, %arg0 : i32, i32
  }
  func.func @transform_4(%arg0: i32, %arg1: i32) -> (i32, i32, i32, i32) {
    %c0_i32 = arith.constant 0 : i32
    %c0_i32_0 = arith.constant 0 : i32
    %c0_i32_1 = arith.constant 0 : i32
    %c0_i32_2 = arith.constant 0 : i32
    return %arg0, %c0_i32, %c0_i32_0, %c0_i32_1 : i32, i32, i32, i32
  }
  func.func @transform_5(%arg0: i32, %arg1: i32) -> (i32, i32, i32, i32) {
    %c0_i32 = arith.constant 0 : i32
    %c0_i32_0 = arith.constant 0 : i32
    %c0_i32_1 = arith.constant 0 : i32
    %c0_i32_2 = arith.constant 0 : i32
    return %arg0, %c0_i32, %c0_i32_0, %c0_i32_1 : i32, i32, i32, i32
  }
}

module attributes {stable_mosaic.version = 11 : i64} {
  func.func @_bn_relu_kernel(%arg0: i32, %arg1: memref<16x128xbf16, #tpu.memory_space<vmem>>, %arg2: memref<16x1xf32, #tpu.memory_space<vmem>>, %arg3: memref<16x1xf32, #tpu.memory_space<vmem>>, %arg4: memref<16x128xbf16, #tpu.memory_space<vmem>>) attributes {dimension_semantics = [#tpu.dimension_semantics<parallel>], iteration_bounds = array<i64: 1>, scalar_prefetch = 0 : i64, scratch_operands = 0 : i64, tpu.core_type = #tpu.core_type<tc>, window_params = [{transform_indices = @transform_0, window_bounds = array<i64: 16, 128>}, {pipeline_mode = #tpu.pipeline_mode<synchronous>, transform_indices = @transform_1, window_bounds = array<i64: 16, 1>}, {pipeline_mode = #tpu.pipeline_mode<synchronous>, transform_indices = @transform_2, window_bounds = array<i64: 16, 1>}, {transform_indices = @transform_3, window_bounds = array<i64: 16, 128>}]} {
    %c0 = arith.constant 0 : index
    %c0_0 = arith.constant 0 : index
    %0 = vector.load %arg1[%c0, %c0_0] : memref<16x128xbf16, #tpu.memory_space<vmem>>, vector<16x128xbf16>
    %1 = arith.extf %0 : vector<16x128xbf16> to vector<16x128xf32>
    %c0_1 = arith.constant 0 : index
    %c0_2 = arith.constant 0 : index
    %2 = vector.load %arg2[%c0_1, %c0_2] : memref<16x1xf32, #tpu.memory_space<vmem>>, vector<16x1xf32>
    %3 = vector.broadcast %2 : vector<16x1xf32> to vector<16x128xf32>
    %4 = arith.mulf %1, %3 : vector<16x128xf32>
    %c0_3 = arith.constant 0 : index
    %c0_4 = arith.constant 0 : index
    %5 = vector.load %arg3[%c0_3, %c0_4] : memref<16x1xf32, #tpu.memory_space<vmem>>, vector<16x1xf32>
    %6 = vector.broadcast %5 : vector<16x1xf32> to vector<16x128xf32>
    %7 = arith.addf %4, %6 : vector<16x128xf32>
    %cst = arith.constant 0.000000e+00 : f32
    %8 = vector.broadcast %cst : f32 to vector<16x128xf32>
    %9 = arith.maximumf %7, %8 : vector<16x128xf32>
    %10 = arith.truncf %9 : vector<16x128xf32> to vector<16x128xbf16>
    %c0_5 = arith.constant 0 : index
    %c0_6 = arith.constant 0 : index
    %11 = vector.load %arg4[%c0_5, %c0_6] : memref<16x128xbf16, #tpu.memory_space<vmem>>, vector<16x128xbf16>
    tpu.vector_store %arg4[%c0_5, %c0_6], %10 {strides = array<i32>} : memref<16x128xbf16, #tpu.memory_space<vmem>>, vector<16x128xbf16>,
    return
  }
  func.func @transform_0(%arg0: i32) -> (i32, i32) {
    %c0_i32 = arith.constant 0 : i32
    %c0_i32_0 = arith.constant 0 : i32
    return %c0_i32, %arg0 : i32, i32
  }
  func.func @transform_1(%arg0: i32) -> (i32, i32) {
    %c0_i32 = arith.constant 0 : i32
    %c0_i32_0 = arith.constant 0 : i32
    %c0_i32_1 = arith.constant 0 : i32
    return %c0_i32, %c0_i32_0 : i32, i32
  }
  func.func @transform_2(%arg0: i32) -> (i32, i32) {
    %c0_i32 = arith.constant 0 : i32
    %c0_i32_0 = arith.constant 0 : i32
    %c0_i32_1 = arith.constant 0 : i32
    return %c0_i32, %c0_i32_0 : i32, i32
  }
  func.func @transform_3(%arg0: i32) -> (i32, i32) {
    %c0_i32 = arith.constant 0 : i32
    %c0_i32_0 = arith.constant 0 : i32
    return %c0_i32, %arg0 : i32, i32
  }
}

module attributes {stable_mosaic.version = 11 : i64} {
  func.func @kernel(%arg0: i32, %arg1: i32, %arg2: memref<64x128xbf16, #tpu.memory_space<vmem>>, %arg3: memref<128x128xbf16, #tpu.memory_space<vmem>>, %arg4: memref<8x128xf32, #tpu.memory_space<vmem>>, %arg5: memref<64x128xbf16, #tpu.memory_space<vmem>>, %arg6: memref<1x4x16x1xf32, #tpu.memory_space<vmem>>, %arg7: memref<1x4x16x1xf32, #tpu.memory_space<vmem>>, %arg8: memref<64x128xf32, #tpu.memory_space<vmem>>) attributes {dimension_semantics = [#tpu.dimension_semantics<parallel>, #tpu.dimension_semantics<arbitrary>], iteration_bounds = array<i64: 1, 1>, scalar_prefetch = 0 : i64, scratch_operands = 1 : i64, tpu.core_type = #tpu.core_type<tc>, window_params = [{transform_indices = @transform_0, window_bounds = array<i64: 64, 128>}, {transform_indices = @transform_1, window_bounds = array<i64: 128, 128>}, {transform_indices = @transform_2, window_bounds = array<i64: 8, 128>}, {transform_indices = @transform_3, window_bounds = array<i64: 64, 128>}, {transform_indices = @transform_4, window_bounds = array<i64: 1, 4, 16, 1>}, {transform_indices = @transform_5, window_bounds = array<i64: 1, 4, 16, 1>}]} {
    %c0_i32 = arith.constant 0 : i32
    %0 = arith.cmpi eq, %arg1, %c0_i32 : i32
    %1 = arith.extui %0 : i1 to i32
    %c0_i32_0 = arith.constant 0 : i32
    %2 = arith.cmpi ne, %1, %c0_i32_0 : i32
    scf.if %2 {
      %cst_10 = arith.constant 0.000000e+00 : f32
      %12 = vector.broadcast %cst_10 : f32 to vector<64x128xf32>
      %c0_11 = arith.constant 0 : index
      %c0_12 = arith.constant 0 : index
      %13 = vector.load %arg8[%c0_11, %c0_12] : memref<64x128xf32, #tpu.memory_space<vmem>>, vector<64x128xf32>
      tpu.vector_store %arg8[%c0_11, %c0_12], %12 {strides = array<i32>} : memref<64x128xf32, #tpu.memory_space<vmem>>, vector<64x128xf32>,
    } else {
    }
    %c0 = arith.constant 0 : index
    %c0_1 = arith.constant 0 : index
    %3 = vector.load %arg8[%c0, %c0_1] : memref<64x128xf32, #tpu.memory_space<vmem>>, vector<64x128xf32>
    %c0_2 = arith.constant 0 : index
    %c0_3 = arith.constant 0 : index
    %4 = vector.load %arg2[%c0_2, %c0_3] : memref<64x128xbf16, #tpu.memory_space<vmem>>, vector<64x128xbf16>
    %c0_4 = arith.constant 0 : index
    %c0_5 = arith.constant 0 : index
    %5 = vector.load %arg3[%c0_4, %c0_5] : memref<128x128xbf16, #tpu.memory_space<vmem>>, vector<128x128xbf16>
    %cst = arith.constant dense<0.000000e+00> : vector<64x128xf32>
    %6 = tpu.matmul %4, %5, %cst {dimension_numbers = #tpu.dot_dimension_numbers<[1], [0], [0], [1], [0, 0, 1, 1], [], []>} : vector<64x128xbf16>, vector<128x128xbf16>, vector<64x128xf32> -> vector<64x128xf32>
    %7 = arith.addf %3, %6 : vector<64x128xf32>
    %c0_6 = arith.constant 0 : index
    %c0_7 = arith.constant 0 : index
    %8 = vector.load %arg8[%c0_6, %c0_7] : memref<64x128xf32, #tpu.memory_space<vmem>>, vector<64x128xf32>
    tpu.vector_store %arg8[%c0_6, %c0_7], %7 {strides = array<i32>} : memref<64x128xf32, #tpu.memory_space<vmem>>, vector<64x128xf32>,
    %c0_i32_8 = arith.constant 0 : i32
    %9 = arith.cmpi eq, %arg1, %c0_i32_8 : i32
    %10 = arith.extui %9 : i1 to i32
    %c0_i32_9 = arith.constant 0 : i32
    %11 = arith.cmpi ne, %10, %c0_i32_9 : i32
    scf.if %11 {
      %c0_10 = arith.constant 0 : index
      %c0_11 = arith.constant 0 : index
      %12 = vector.load %arg8[%c0_10, %c0_11] : memref<64x128xf32, #tpu.memory_space<vmem>>, vector<64x128xf32>
      %13 = arith.truncf %12 : vector<64x128xf32> to vector<64x128xbf16>
      %c0_12 = arith.constant 0 : index
      %c0_13 = arith.constant 0 : index
      %14 = vector.load %arg5[%c0_12, %c0_13] : memref<64x128xbf16, #tpu.memory_space<vmem>>, vector<64x128xbf16>
      tpu.vector_store %arg5[%c0_12, %c0_13], %13 {strides = array<i32>} : memref<64x128xbf16, #tpu.memory_space<vmem>>, vector<64x128xbf16>,
      %c0_14 = arith.constant 0 : index
      %c0_15 = arith.constant 0 : index
      %15 = vector.load %arg4[%c0_14, %c0_15] : memref<8x128xf32, #tpu.memory_space<vmem>>, vector<8x128xf32>
      %16 = vector.extract_strided_slice %12 {offsets = [0, 0], sizes = [16, 128], strides = [1, 1]} : vector<64x128xf32> to vector<16x128xf32>
      %17 = vector.extract_strided_slice %15 {offsets = [0, 0], sizes = [1, 128], strides = [1, 1]} : vector<8x128xf32> to vector<1x128xf32>
      %18 = vector.broadcast %17 : vector<1x128xf32> to vector<16x128xf32>
      %19 = arith.mulf %16, %18 : vector<16x128xf32>
      %cst_16 = arith.constant dense<0.000000e+00> : vector<16xf32>
      %20 = vector.multi_reduction <add>, %19, %cst_16 [1] : vector<16x128xf32> to vector<16xf32>
      %21 = vector.shape_cast %20 : vector<16xf32> to vector<16x1xf32>
      %c0_17 = arith.constant 0 : index
      %c0_18 = arith.constant 0 : index
      %c0_19 = arith.constant 0 : index
      %c0_20 = arith.constant 0 : index
      %22 = vector.load %arg6[%c0_17, %c0_18, %c0_19, %c0_20] : memref<1x4x16x1xf32, #tpu.memory_space<vmem>>, vector<1x1x16x1xf32>
      %23 = vector.shape_cast %22 : vector<1x1x16x1xf32> to vector<16x1xf32>
      %24 = vector.shape_cast %21 : vector<16x1xf32> to vector<1x1x16x1xf32>
      tpu.vector_store %arg6[%c0_17, %c0_18, %c0_19, %c0_20], %24 {strides = array<i32>} : memref<1x4x16x1xf32, #tpu.memory_space<vmem>>, vector<1x1x16x1xf32>,
      %25 = arith.mulf %19, %16 : vector<16x128xf32>
      %cst_21 = arith.constant dense<0.000000e+00> : vector<16xf32>
      %26 = vector.multi_reduction <add>, %25, %cst_21 [1] : vector<16x128xf32> to vector<16xf32>
      %27 = vector.shape_cast %26 : vector<16xf32> to vector<16x1xf32>
      %c0_22 = arith.constant 0 : index
      %c0_23 = arith.constant 0 : index
      %c0_24 = arith.constant 0 : index
      %c0_25 = arith.constant 0 : index
      %28 = vector.load %arg7[%c0_22, %c0_23, %c0_24, %c0_25] : memref<1x4x16x1xf32, #tpu.memory_space<vmem>>, vector<1x1x16x1xf32>
      %29 = vector.shape_cast %28 : vector<1x1x16x1xf32> to vector<16x1xf32>
      %30 = vector.shape_cast %27 : vector<16x1xf32> to vector<1x1x16x1xf32>
      tpu.vector_store %arg7[%c0_22, %c0_23, %c0_24, %c0_25], %30 {strides = array<i32>} : memref<1x4x16x1xf32, #tpu.memory_space<vmem>>, vector<1x1x16x1xf32>,
      %31 = vector.extract_strided_slice %12 {offsets = [16, 0], sizes = [16, 128], strides = [1, 1]} : vector<64x128xf32> to vector<16x128xf32>
      %32 = vector.extract_strided_slice %15 {offsets = [1, 0], sizes = [1, 128], strides = [1, 1]} : vector<8x128xf32> to vector<1x128xf32>
      %33 = vector.broadcast %32 : vector<1x128xf32> to vector<16x128xf32>
      %34 = arith.mulf %31, %33 : vector<16x128xf32>
      %cst_26 = arith.constant dense<0.000000e+00> : vector<16xf32>
      %35 = vector.multi_reduction <add>, %34, %cst_26 [1] : vector<16x128xf32> to vector<16xf32>
      %36 = vector.shape_cast %35 : vector<16xf32> to vector<16x1xf32>
      %c0_27 = arith.constant 0 : index
      %c1 = arith.constant 1 : index
      %c0_28 = arith.constant 0 : index
      %c0_29 = arith.constant 0 : index
      %37 = vector.load %arg6[%c0_27, %c1, %c0_28, %c0_29] : memref<1x4x16x1xf32, #tpu.memory_space<vmem>>, vector<1x1x16x1xf32>
      %38 = vector.shape_cast %37 : vector<1x1x16x1xf32> to vector<16x1xf32>
      %39 = vector.shape_cast %36 : vector<16x1xf32> to vector<1x1x16x1xf32>
      tpu.vector_store %arg6[%c0_27, %c1, %c0_28, %c0_29], %39 {strides = array<i32>} : memref<1x4x16x1xf32, #tpu.memory_space<vmem>>, vector<1x1x16x1xf32>,
      %40 = arith.mulf %34, %31 : vector<16x128xf32>
      %cst_30 = arith.constant dense<0.000000e+00> : vector<16xf32>
      %41 = vector.multi_reduction <add>, %40, %cst_30 [1] : vector<16x128xf32> to vector<16xf32>
      %42 = vector.shape_cast %41 : vector<16xf32> to vector<16x1xf32>
      %c0_31 = arith.constant 0 : index
      %c1_32 = arith.constant 1 : index
      %c0_33 = arith.constant 0 : index
      %c0_34 = arith.constant 0 : index
      %43 = vector.load %arg7[%c0_31, %c1_32, %c0_33, %c0_34] : memref<1x4x16x1xf32, #tpu.memory_space<vmem>>, vector<1x1x16x1xf32>
      %44 = vector.shape_cast %43 : vector<1x1x16x1xf32> to vector<16x1xf32>
      %45 = vector.shape_cast %42 : vector<16x1xf32> to vector<1x1x16x1xf32>
      tpu.vector_store %arg7[%c0_31, %c1_32, %c0_33, %c0_34], %45 {strides = array<i32>} : memref<1x4x16x1xf32, #tpu.memory_space<vmem>>, vector<1x1x16x1xf32>,
      %46 = vector.extract_strided_slice %12 {offsets = [32, 0], sizes = [16, 128], strides = [1, 1]} : vector<64x128xf32> to vector<16x128xf32>
      %47 = vector.extract_strided_slice %15 {offsets = [2, 0], sizes = [1, 128], strides = [1, 1]} : vector<8x128xf32> to vector<1x128xf32>
      %48 = vector.broadcast %47 : vector<1x128xf32> to vector<16x128xf32>
      %49 = arith.mulf %46, %48 : vector<16x128xf32>
      %cst_35 = arith.constant dense<0.000000e+00> : vector<16xf32>
      %50 = vector.multi_reduction <add>, %49, %cst_35 [1] : vector<16x128xf32> to vector<16xf32>
      %51 = vector.shape_cast %50 : vector<16xf32> to vector<16x1xf32>
      %c0_36 = arith.constant 0 : index
      %c2 = arith.constant 2 : index
      %c0_37 = arith.constant 0 : index
      %c0_38 = arith.constant 0 : index
      %52 = vector.load %arg6[%c0_36, %c2, %c0_37, %c0_38] : memref<1x4x16x1xf32, #tpu.memory_space<vmem>>, vector<1x1x16x1xf32>
      %53 = vector.shape_cast %52 : vector<1x1x16x1xf32> to vector<16x1xf32>
      %54 = vector.shape_cast %51 : vector<16x1xf32> to vector<1x1x16x1xf32>
      tpu.vector_store %arg6[%c0_36, %c2, %c0_37, %c0_38], %54 {strides = array<i32>} : memref<1x4x16x1xf32, #tpu.memory_space<vmem>>, vector<1x1x16x1xf32>,
      %55 = arith.mulf %49, %46 : vector<16x128xf32>
      %cst_39 = arith.constant dense<0.000000e+00> : vector<16xf32>
      %56 = vector.multi_reduction <add>, %55, %cst_39 [1] : vector<16x128xf32> to vector<16xf32>
      %57 = vector.shape_cast %56 : vector<16xf32> to vector<16x1xf32>
      %c0_40 = arith.constant 0 : index
      %c2_41 = arith.constant 2 : index
      %c0_42 = arith.constant 0 : index
      %c0_43 = arith.constant 0 : index
      %58 = vector.load %arg7[%c0_40, %c2_41, %c0_42, %c0_43] : memref<1x4x16x1xf32, #tpu.memory_space<vmem>>, vector<1x1x16x1xf32>
      %59 = vector.shape_cast %58 : vector<1x1x16x1xf32> to vector<16x1xf32>
      %60 = vector.shape_cast %57 : vector<16x1xf32> to vector<1x1x16x1xf32>
      tpu.vector_store %arg7[%c0_40, %c2_41, %c0_42, %c0_43], %60 {strides = array<i32>} : memref<1x4x16x1xf32, #tpu.memory_space<vmem>>, vector<1x1x16x1xf32>,
      %61 = vector.extract_strided_slice %12 {offsets = [48, 0], sizes = [16, 128], strides = [1, 1]} : vector<64x128xf32> to vector<16x128xf32>
      %62 = vector.extract_strided_slice %15 {offsets = [3, 0], sizes = [1, 128], strides = [1, 1]} : vector<8x128xf32> to vector<1x128xf32>
      %63 = vector.broadcast %62 : vector<1x128xf32> to vector<16x128xf32>
      %64 = arith.mulf %61, %63 : vector<16x128xf32>
      %cst_44 = arith.constant dense<0.000000e+00> : vector<16xf32>
      %65 = vector.multi_reduction <add>, %64, %cst_44 [1] : vector<16x128xf32> to vector<16xf32>
      %66 = vector.shape_cast %65 : vector<16xf32> to vector<16x1xf32>
      %c0_45 = arith.constant 0 : index
      %c3 = arith.constant 3 : index
      %c0_46 = arith.constant 0 : index
      %c0_47 = arith.constant 0 : index
      %67 = vector.load %arg6[%c0_45, %c3, %c0_46, %c0_47] : memref<1x4x16x1xf32, #tpu.memory_space<vmem>>, vector<1x1x16x1xf32>
      %68 = vector.shape_cast %67 : vector<1x1x16x1xf32> to vector<16x1xf32>
      %69 = vector.shape_cast %66 : vector<16x1xf32> to vector<1x1x16x1xf32>
      tpu.vector_store %arg6[%c0_45, %c3, %c0_46, %c0_47], %69 {strides = array<i32>} : memref<1x4x16x1xf32, #tpu.memory_space<vmem>>, vector<1x1x16x1xf32>,
      %70 = arith.mulf %64, %61 : vector<16x128xf32>
      %cst_48 = arith.constant dense<0.000000e+00> : vector<16xf32>
      %71 = vector.multi_reduction <add>, %70, %cst_48 [1] : vector<16x128xf32> to vector<16xf32>
      %72 = vector.shape_cast %71 : vector<16xf32> to vector<16x1xf32>
      %c0_49 = arith.constant 0 : index
      %c3_50 = arith.constant 3 : index
      %c0_51 = arith.constant 0 : index
      %c0_52 = arith.constant 0 : index
      %73 = vector.load %arg7[%c0_49, %c3_50, %c0_51, %c0_52] : memref<1x4x16x1xf32, #tpu.memory_space<vmem>>, vector<1x1x16x1xf32>
      %74 = vector.shape_cast %73 : vector<1x1x16x1xf32> to vector<16x1xf32>
      %75 = vector.shape_cast %72 : vector<16x1xf32> to vector<1x1x16x1xf32>
      tpu.vector_store %arg7[%c0_49, %c3_50, %c0_51, %c0_52], %75 {strides = array<i32>} : memref<1x4x16x1xf32, #tpu.memory_space<vmem>>, vector<1x1x16x1xf32>,
    } else {
    }
    return
  }
  func.func @transform_0(%arg0: i32, %arg1: i32) -> (i32, i32) {
    %c0_i32 = arith.constant 0 : i32
    %c0_i32_0 = arith.constant 0 : i32
    return %c0_i32, %arg1 : i32, i32
  }
  func.func @transform_1(%arg0: i32, %arg1: i32) -> (i32, i32) {
    %c0_i32 = arith.constant 0 : i32
    return %arg1, %arg0 : i32, i32
  }
  func.func @transform_2(%arg0: i32, %arg1: i32) -> (i32, i32) {
    %c0_i32 = arith.constant 0 : i32
    %c0_i32_0 = arith.constant 0 : i32
    return %c0_i32, %arg0 : i32, i32
  }
  func.func @transform_3(%arg0: i32, %arg1: i32) -> (i32, i32) {
    %c0_i32 = arith.constant 0 : i32
    %c0_i32_0 = arith.constant 0 : i32
    return %c0_i32, %arg0 : i32, i32
  }
  func.func @transform_4(%arg0: i32, %arg1: i32) -> (i32, i32, i32, i32) {
    %c0_i32 = arith.constant 0 : i32
    %c0_i32_0 = arith.constant 0 : i32
    %c0_i32_1 = arith.constant 0 : i32
    %c0_i32_2 = arith.constant 0 : i32
    return %arg0, %c0_i32, %c0_i32_0, %c0_i32_1 : i32, i32, i32, i32
  }
  func.func @transform_5(%arg0: i32, %arg1: i32) -> (i32, i32, i32, i32) {
    %c0_i32 = arith.constant 0 : i32
    %c0_i32_0 = arith.constant 0 : i32
    %c0_i32_1 = arith.constant 0 : i32
    %c0_i32_2 = arith.constant 0 : i32
    return %arg0, %c0_i32, %c0_i32_0, %c0_i32_1 : i32, i32, i32, i32
  }
}

module attributes {stable_mosaic.version = 11 : i64} {
  func.func @_bn_relu_kernel(%arg0: i32, %arg1: memref<64x128xbf16, #tpu.memory_space<vmem>>, %arg2: memref<64x1xf32, #tpu.memory_space<vmem>>, %arg3: memref<64x1xf32, #tpu.memory_space<vmem>>, %arg4: memref<64x128xbf16, #tpu.memory_space<vmem>>) attributes {dimension_semantics = [#tpu.dimension_semantics<parallel>], iteration_bounds = array<i64: 1>, scalar_prefetch = 0 : i64, scratch_operands = 0 : i64, tpu.core_type = #tpu.core_type<tc>, window_params = [{transform_indices = @transform_0, window_bounds = array<i64: 64, 128>}, {pipeline_mode = #tpu.pipeline_mode<synchronous>, transform_indices = @transform_1, window_bounds = array<i64: 64, 1>}, {pipeline_mode = #tpu.pipeline_mode<synchronous>, transform_indices = @transform_2, window_bounds = array<i64: 64, 1>}, {transform_indices = @transform_3, window_bounds = array<i64: 64, 128>}]} {
    %c0 = arith.constant 0 : index
    %c0_0 = arith.constant 0 : index
    %0 = vector.load %arg1[%c0, %c0_0] : memref<64x128xbf16, #tpu.memory_space<vmem>>, vector<64x128xbf16>
    %1 = arith.extf %0 : vector<64x128xbf16> to vector<64x128xf32>
    %c0_1 = arith.constant 0 : index
    %c0_2 = arith.constant 0 : index
    %2 = vector.load %arg2[%c0_1, %c0_2] : memref<64x1xf32, #tpu.memory_space<vmem>>, vector<64x1xf32>
    %3 = vector.broadcast %2 : vector<64x1xf32> to vector<64x128xf32>
    %4 = arith.mulf %1, %3 : vector<64x128xf32>
    %c0_3 = arith.constant 0 : index
    %c0_4 = arith.constant 0 : index
    %5 = vector.load %arg3[%c0_3, %c0_4] : memref<64x1xf32, #tpu.memory_space<vmem>>, vector<64x1xf32>
    %6 = vector.broadcast %5 : vector<64x1xf32> to vector<64x128xf32>
    %7 = arith.addf %4, %6 : vector<64x128xf32>
    %cst = arith.constant 0.000000e+00 : f32
    %8 = vector.broadcast %cst : f32 to vector<64x128xf32>
    %9 = arith.maximumf %7, %8 : vector<64x128xf32>
    %10 = arith.truncf %9 : vector<64x128xf32> to vector<64x128xbf16>
    %c0_5 = arith.constant 0 : index
    %c0_6 = arith.constant 0 : index
    %11 = vector.load %arg4[%c0_5, %c0_6] : memref<64x128xbf16, #tpu.memory_space<vmem>>, vector<64x128xbf16>
    tpu.vector_store %arg4[%c0_5, %c0_6], %10 {strides = array<i32>} : memref<64x128xbf16, #tpu.memory_space<vmem>>, vector<64x128xbf16>,
    return
  }
  func.func @transform_0(%arg0: i32) -> (i32, i32) {
    %c0_i32 = arith.constant 0 : i32
    %c0_i32_0 = arith.constant 0 : i32
    return %c0_i32, %arg0 : i32, i32
  }
  func.func @transform_1(%arg0: i32) -> (i32, i32) {
    %c0_i32 = arith.constant 0 : i32
    %c0_i32_0 = arith.constant 0 : i32
    %c0_i32_1 = arith.constant 0 : i32
    return %c0_i32, %c0_i32_0 : i32, i32
  }
  func.func @transform_2(%arg0: i32) -> (i32, i32) {
    %c0_i32 = arith.constant 0 : i32
    %c0_i32_0 = arith.constant 0 : i32
    %c0_i32_1 = arith.constant 0 : i32
    return %c0_i32, %c0_i32_0 : i32, i32
  }
  func.func @transform_3(%arg0: i32) -> (i32, i32) {
    %c0_i32 = arith.constant 0 : i32
    %c0_i32_0 = arith.constant 0 : i32
    return %c0_i32, %arg0 : i32, i32
  }
}

module attributes {stable_mosaic.version = 11 : i64} {
  func.func @_gemm_tanh_kernel(%arg0: i32, %arg1: i32, %arg2: memref<64x128xbf16, #tpu.memory_space<vmem>>, %arg3: memref<128x128xbf16, #tpu.memory_space<vmem>>, %arg4: memref<64x128xf32, #tpu.memory_space<vmem>>, %arg5: memref<64x128xf32, #tpu.memory_space<vmem>>) attributes {dimension_semantics = [#tpu.dimension_semantics<parallel>, #tpu.dimension_semantics<arbitrary>], iteration_bounds = array<i64: 2, 1>, scalar_prefetch = 0 : i64, scratch_operands = 1 : i64, tpu.core_type = #tpu.core_type<tc>, window_params = [{transform_indices = @transform_0, window_bounds = array<i64: 64, 128>}, {transform_indices = @transform_1, window_bounds = array<i64: 128, 128>}, {transform_indices = @transform_2, window_bounds = array<i64: 64, 128>}]} {
    %c0_i32 = arith.constant 0 : i32
    %0 = arith.cmpi eq, %arg1, %c0_i32 : i32
    %1 = arith.extui %0 : i1 to i32
    %c0_i32_0 = arith.constant 0 : i32
    %2 = arith.cmpi ne, %1, %c0_i32_0 : i32
    scf.if %2 {
      %cst_10 = arith.constant 0.000000e+00 : f32
      %12 = vector.broadcast %cst_10 : f32 to vector<64x128xf32>
      %c0_11 = arith.constant 0 : index
      %c0_12 = arith.constant 0 : index
      %13 = vector.load %arg5[%c0_11, %c0_12] : memref<64x128xf32, #tpu.memory_space<vmem>>, vector<64x128xf32>
      tpu.vector_store %arg5[%c0_11, %c0_12], %12 {strides = array<i32>} : memref<64x128xf32, #tpu.memory_space<vmem>>, vector<64x128xf32>,
    } else {
    }
    %c0 = arith.constant 0 : index
    %c0_1 = arith.constant 0 : index
    %3 = vector.load %arg5[%c0, %c0_1] : memref<64x128xf32, #tpu.memory_space<vmem>>, vector<64x128xf32>
    %c0_2 = arith.constant 0 : index
    %c0_3 = arith.constant 0 : index
    %4 = vector.load %arg2[%c0_2, %c0_3] : memref<64x128xbf16, #tpu.memory_space<vmem>>, vector<64x128xbf16>
    %c0_4 = arith.constant 0 : index
    %c0_5 = arith.constant 0 : index
    %5 = vector.load %arg3[%c0_4, %c0_5] : memref<128x128xbf16, #tpu.memory_space<vmem>>, vector<128x128xbf16>
    %cst = arith.constant dense<0.000000e+00> : vector<64x128xf32>
    %6 = tpu.matmul %4, %5, %cst {dimension_numbers = #tpu.dot_dimension_numbers<[1], [0], [0], [1], [0, 0, 1, 1], [], []>} : vector<64x128xbf16>, vector<128x128xbf16>, vector<64x128xf32> -> vector<64x128xf32>
    %7 = arith.addf %3, %6 : vector<64x128xf32>
    %c0_6 = arith.constant 0 : index
    %c0_7 = arith.constant 0 : index
    %8 = vector.load %arg5[%c0_6, %c0_7] : memref<64x128xf32, #tpu.memory_space<vmem>>, vector<64x128xf32>
    tpu.vector_store %arg5[%c0_6, %c0_7], %7 {strides = array<i32>} : memref<64x128xf32, #tpu.memory_space<vmem>>, vector<64x128xf32>,
    %c0_i32_8 = arith.constant 0 : i32
    %9 = arith.cmpi eq, %arg1, %c0_i32_8 : i32
    %10 = arith.extui %9 : i1 to i32
    %c0_i32_9 = arith.constant 0 : i32
    %11 = arith.cmpi ne, %10, %c0_i32_9 : i32
    scf.if %11 {
      %c0_10 = arith.constant 0 : index
      %c0_11 = arith.constant 0 : index
      %12 = vector.load %arg5[%c0_10, %c0_11] : memref<64x128xf32, #tpu.memory_space<vmem>>, vector<64x128xf32>
      %13 = math.tanh %12 : vector<64x128xf32>
      %c0_12 = arith.constant 0 : index
      %c0_13 = arith.constant 0 : index
      %14 = vector.load %arg4[%c0_12, %c0_13] : memref<64x128xf32, #tpu.memory_space<vmem>>, vector<64x128xf32>
      tpu.vector_store %arg4[%c0_12, %c0_13], %13 {strides = array<i32>} : memref<64x128xf32, #tpu.memory_space<vmem>>, vector<64x128xf32>,
    } else {
    }
    return
  }
  func.func @transform_0(%arg0: i32, %arg1: i32) -> (i32, i32) {
    %c0_i32 = arith.constant 0 : i32
    %c0_i32_0 = arith.constant 0 : i32
    return %c0_i32, %arg1 : i32, i32
  }
  func.func @transform_1(%arg0: i32, %arg1: i32) -> (i32, i32) {
    %c0_i32 = arith.constant 0 : i32
    return %arg1, %arg0 : i32, i32
  }
  func.func @transform_2(%arg0: i32, %arg1: i32) -> (i32, i32) {
    %c0_i32 = arith.constant 0 : i32
    %c0_i32_0 = arith.constant 0 : i32
    return %c0_i32, %arg0 : i32, i32
  }
}

</mosaic_0001>

<llo_original>
// kernel: _lambda_.6
$region0: #{_lambda_.6}
  #allocation0 [shape = 'u32[]', space=smem, size = 0x4, offset = 0x4, fixed_abs, tag = 'smem constant byte address 0x4 - core index']
  #allocation1 [shape = 'u32[72,128]{1,0:T(1,128)}', space=vmem, size = 0x9000, scoped, tag = 'internal scratch']
  %s0 = inlined_call_operand.vmem [shape: bf16[16,128], index: 0, kind: input, shape index: {}]
  %s1 = inlined_call_operand.vmem [shape: f32[16,1], index: 1, kind: input, shape index: {}]
  %s2 = inlined_call_operand.vmem [shape: f32[16,1], index: 2, kind: input, shape index: {}]
  %s3 = inlined_call_operand.vmem [shape: bf16[16,128], index: 3, kind: output, shape index: {}]
  %s4 = sld [smem:[#allocation0]]
  $region22: #{_lambda_.6} parent=0
    _
  %s6 = ssub.s32 1, %s4
  %s7 = scalar_select 0, %s6, %s4
  // Predicated region
  $region2: #{_lambda_.6} parent=0 // pred_check
    _
  $region3: #{_lambda_.6} parent=0 // pred_check_branch
    %9 = sbr.rel (0) target = $region5
  $region4: #{_lambda_.6} parent=0 // pred_region
    _
  $region5: #{_lambda_.6} parent=0 // pred_fallthru
    _
  // Predicated region
  $region6: #{_lambda_.6} parent=0 // pred_check
    _
  $region7: #{_lambda_.6} parent=0 // pred_check_branch
    %11 = sbr.rel (0) target = $region9
  $region8: #{_lambda_.6} parent=0 // pred_region
    _
  $region9: #{_lambda_.6} parent=0 // pred_fallthru
    _
  // Predicated region
  $region10: #{_lambda_.6} parent=0 // pred_check
    _
  $region11: #{_lambda_.6} parent=0 // pred_check_branch
    %13 = sbr.rel (0) target = $region13
  $region12: #{_lambda_.6} parent=0 // pred_region
    _
  $region13: #{_lambda_.6} parent=0 // pred_fallthru
    _
  %v14 = vld [vmem:[%s0] sm:$0xf]
  %v15 = vld [vmem:[%s0 + $0x4] sm:$0xf]
  %v16 = vunpack.c.l.bf16 %v14
  %v17 = vunpack.c.l.bf16 %v15
  %v18 = vld [vmem:[%s1] sm:$0xff]
  %v19 = vld [vmem:[%s1 + $0x8] sm:$0xff]
  %21 = vset.pattern.permute.xlu0 0
  %22 = vperm.xlu0 %21, %v18
  %v23 = vpop.permute.xlu0 %22
  %26 = vset.pattern.permute.xlu0 0
  %27 = vperm.xlu0 %26, %v19
  %v28 = vpop.permute.xlu0 %27
  %v30 = vmul.f32 %v16, %v23
  %v31 = vmul.f32 %v17, %v28
  %v32 = vld [vmem:[%s2] sm:$0xff]
  %v33 = vld [vmem:[%s2 + $0x8] sm:$0xff]
  %35 = vset.pattern.permute.xlu0 0
  %36 = vperm.xlu0 %35, %v32
  %v37 = vpop.permute.xlu0 %36
  %40 = vset.pattern.permute.xlu0 0
  %41 = vperm.xlu0 %40, %v33
  %v42 = vpop.permute.xlu0 %41
  %v44 = vadd.f32 %v30, %v37
  %v45 = vadd.f32 %v31, %v42
  %v46 = vmax.f32 %v44, 0.0
  %v47 = vmax.f32 %v45, 0.0
  %v48 = vpack.c.bf16 %v46, %v46
  %v49 = vpack.c.bf16 %v47, %v47
  %50 = vst [vmem:[%s3] sm:$0xf] %v48
  %51 = vst [vmem:[%s3 + $0x4] sm:$0xf] %v49
  // Predicated region
  $region14: #{_lambda_.6} parent=0 // pred_check
    _
  $region15: #{_lambda_.6} parent=0 // pred_check_branch
    %53 = sbr.rel (0) target = $region17
  $region16: #{_lambda_.6} parent=0 // pred_region
    _
  $region17: #{_lambda_.6} parent=0 // pred_fallthru
    _
  // Predicated region
  $region18: #{_lambda_.6} parent=0 // pred_check
    _
  $region19: #{_lambda_.6} parent=0 // pred_check_branch
    %55 = sbr.rel (0) target = $region21
  $region20: #{_lambda_.6} parent=0 // pred_region
    _
  $region21: #{_lambda_.6} parent=0 // pred_fallthru
    _

// kernel: _lambda_.5
$region0: #{_lambda_.5}
  #allocation0 [shape = 'u32[]', space=smem, size = 0x4, offset = 0x4, fixed_abs, tag = 'smem constant byte address 0x4 - core index']
  #allocation1 [shape = 'u32[72,128]{1,0:T(1,128)}', space=vmem, size = 0x9000, scoped, tag = 'internal scratch']
  #allocation2 [shape = 'f32[16,128]{1,0:T(8,128)}', space=vmem, size = 0x2000, scoped, tag = 'scratch operand']
  %s0 = inlined_call_operand.vmem [shape: bf16[16,128], index: 0, kind: input, shape index: {}]
  %s1 = inlined_call_operand.vmem [shape: bf16[128,128], index: 1, kind: input, shape index: {}]
  %s2 = inlined_call_operand.vmem [shape: f32[8,128], index: 2, kind: input, shape index: {}]
  %s3 = inlined_call_operand.vmem [shape: bf16[16,128], index: 3, kind: output, shape index: {0}]
  %s4 = inlined_call_operand.vmem [shape: f32[1,1,16,1], index: 4, kind: output, shape index: {1}]
  %s5 = inlined_call_operand.vmem [shape: f32[1,1,16,1], index: 5, kind: output, shape index: {2}]
  %6 = xla_tuple %s3, %s4, %s5
  %s7 = sld [smem:[#allocation0]]
  $region46: #{_lambda_.5} parent=0
    _
  %s9 = ssub.s32 1, %s7
  %s10 = scalar_select 0, %s9, %s7
  // Predicated region
  $region2: #{_lambda_.5} parent=0 // pred_check
    _
  $region3: #{_lambda_.5} parent=0 // pred_check_branch
    %12 = sbr.rel (0) target = $region5
  $region4: #{_lambda_.5} parent=0 // pred_region
    _
  $region5: #{_lambda_.5} parent=0 // pred_fallthru
    _
  // Predicated region
  $region6: #{_lambda_.5} parent=0 // pred_check
    _
  $region7: #{_lambda_.5} parent=0 // pred_check_branch
    %14 = sbr.rel (0) target = $region9
  $region8: #{_lambda_.5} parent=0 // pred_region
    _
  $region9: #{_lambda_.5} parent=0 // pred_fallthru
    _
  // Predicated region
  $region10: #{_lambda_.5} parent=0 // pred_check
    _
  $region11: #{_lambda_.5} parent=0 // pred_check_branch
    %16 = sbr.rel (0) target = $region13
  $region12: #{_lambda_.5} parent=0 // pred_region
    _
  $region13: #{_lambda_.5} parent=0 // pred_fallthru
    _
  %p17 = scmp.eq.s32.totalorder 0, 0
  // Predicated region
  $region14: #{_lambda_.5} parent=0 // pred_check
    %p18 = pneg %p17
  $region15: #{_lambda_.5} parent=0 // pred_check_branch
    %20 = sbr.rel (%p18) target = $region17
  $region16: #{_lambda_.5} parent=0 // pred_region
    %21 = vst [vmem:[#allocation2] sm:$0xff] 0.0
    %22 = vst [vmem:[#allocation2 + $0x8] sm:$0xff] 0.0
  $region17: #{_lambda_.5} parent=0 // pred_fallthru
    _
  %v23 = vld [vmem:[#allocation2] sm:$0xff]
  %v24 = vld [vmem:[#allocation2 + $0x8] sm:$0xff]
  %v25 = vld [vmem:[%s0] sm:$0xf]
  %v26 = vld [vmem:[%s0 + $0x4] sm:$0xf]
  %v27 = vld [vmem:[%s1] sm:$0xf]
  %v28 = vld [vmem:[%s1 + $0x4] sm:$0xf]
  %v29 = vld [vmem:[%s1 + $0x8] sm:$0xf]
  %v30 = vld [vmem:[%s1 + $0xc] sm:$0xf]
  %v31 = vld [vmem:[%s1 + $0x10] sm:$0xf]
  %v32 = vld [vmem:[%s1 + $0x14] sm:$0xf]
  %v33 = vld [vmem:[%s1 + $0x18] sm:$0xf]
  %v34 = vld [vmem:[%s1 + $0x1c] sm:$0xf]
  %v35 = vld [vmem:[%s1 + $0x20] sm:$0xf]
  %v36 = vld [vmem:[%s1 + $0x24] sm:$0xf]
  %v37 = vld [vmem:[%s1 + $0x28] sm:$0xf]
  %v38 = vld [vmem:[%s1 + $0x2c] sm:$0xf]
  %v39 = vld [vmem:[%s1 + $0x30] sm:$0xf]
  %v40 = vld [vmem:[%s1 + $0x34] sm:$0xf]
  %v41 = vld [vmem:[%s1 + $0x38] sm:$0xf]
  %v42 = vld [vmem:[%s1 + $0x3c] sm:$0xf]
  %v45 = vunpack.c.l.b16 %v25
  %v46 = vunpack.c.l.b16 %v26
  %v47 = vpack.c.b16 %v46, %v45
  %v65 = vunpack.c.l.b16 %v27
  %v66 = vunpack.c.l.b16 %v28
  %v67 = vunpack.c.l.b16 %v29
  %v68 = vunpack.c.l.b16 %v30
  %v69 = vunpack.c.l.b16 %v31
  %v70 = vunpack.c.l.b16 %v32
  %v71 = vunpack.c.l.b16 %v33
  %v72 = vunpack.c.l.b16 %v34
  %v73 = vunpack.c.l.b16 %v35
  %v74 = vunpack.c.l.b16 %v36
  %v75 = vunpack.c.l.b16 %v37
  %v76 = vunpack.c.l.b16 %v38
  %v77 = vunpack.c.l.b16 %v39
  %v78 = vunpack.c.l.b16 %v40
  %v79 = vunpack.c.l.b16 %v41
  %v80 = vunpack.c.l.b16 %v42
  %v81 = vpack.c.b16 %v66, %v65
  %v82 = vpack.c.b16 %v68, %v67
  %v83 = vpack.c.b16 %v70, %v69
  %v84 = vpack.c.b16 %v72, %v71
  %v85 = vpack.c.b16 %v74, %v73
  %v86 = vpack.c.b16 %v76, %v75
  %v87 = vpack.c.b16 %v78, %v77
  %v88 = vpack.c.b16 %v80, %v79
  %97 = vmatpush.bf16.msra.mxu0 %v88
  %98 = vmatpush.bf16.msra.mxu0 %v87
  %99 = vmatpush.bf16.msra.mxu0 %v86
  %100 = vmatpush.bf16.msra.mxu0 %v85
  %101 = vmatpush.bf16.msra.mxu0 %v84
  %102 = vmatpush.bf16.msra.mxu0 %v83
  %103 = vmatpush.bf16.msra.mxu0 %v82
  %104 = vmatpush.bf16.msra.mxu0 %v81
  %105 = vmatmul.bf16.gmra.mxu0 %v47
  %v106 = vpop.f32.mrf.mxu0
  %v107 = vadd.f32 0.0, %v106
  %v108 = vpop.f32.mrf.mxu0
  %v109 = vadd.f32 0.0, %v108
  %110 = vdwg.mxu0
  %v111 = vadd.f32 %v23, %v107
  %v112 = vadd.f32 %v24, %v109
  %113 = vst [vmem:[#allocation2] sm:$0xff] %v111
  %114 = vst [vmem:[#allocation2 + $0x8] sm:$0xff] %v112
  // Predicated region
  $region18: #{_lambda_.5} parent=0 // pred_check
    %p115 = pneg %p17
  $region19: #{_lambda_.5} parent=0 // pred_check_branch
    %117 = sbr.rel (%p115) target = $region21
  $region20: #{_lambda_.5} parent=0 // pred_region
    %v118 = vld [vmem:[#allocation2] sm:$0xff]
    %v119 = vld [vmem:[#allocation2 + $0x8] sm:$0xff]
    %v120 = vpack.c.bf16 %v118, %v118
    %v121 = vpack.c.bf16 %v119, %v119
    %122 = vst [vmem:[%s3] sm:$0xf] %v120
    %123 = vst [vmem:[%s3 + $0x4] sm:$0xf] %v121
    %v124 = vld [vmem:[%s2] sm:$0xff]
    %v125 = vperm.slane %v124, 0
    %v126 = vmul.f32 %v118, %v125
    %v127 = vmul.f32 %v119, %v125
    %128 = vadd.xlane.f32.xlu0 %v126
    %v129 = vpop.xlane.xlu0 %128
    %130 = vadd.xlane.f32.xlu0 %v127
    %v131 = vpop.xlane.xlu0 %130
    %vm132 = vcmask 7168
    %133 = vst.msk [vmem:[%s4] sm:$0xff] %vm132, %v129
    %134 = vst.msk [vmem:[%s4 + $0x8] sm:$0xff] %vm132, %v131
    %v135 = vmul.f32 %v126, %v118
    %v136 = vmul.f32 %v127, %v119
    %137 = vadd.xlane.f32.xlu0 %v135
    %v138 = vpop.xlane.xlu0 %137
    %139 = vadd.xlane.f32.xlu0 %v136
    %v140 = vpop.xlane.xlu0 %139
    %141 = vst.msk [vmem:[%s5] sm:$0xff] %vm132, %v138
    %142 = vst.msk [vmem:[%s5 + $0x8] sm:$0xff] %vm132, %v140
  $region21: #{_lambda_.5} parent=0 // pred_fallthru
    _
  // Predicated region
  $region22: #{_lambda_.5} parent=0 // pred_check
    _
  $region23: #{_lambda_.5} parent=0 // pred_check_branch
    %144 = sbr.rel (0) target = $region25
  $region24: #{_lambda_.5} parent=0 // pred_region
    _
  $region25: #{_lambda_.5} parent=0 // pred_fallthru
    _
  // Predicated region
  $region26: #{_lambda_.5} parent=0 // pred_check
    _
  $region27: #{_lambda_.5} parent=0 // pred_check_branch
    %146 = sbr.rel (0) target = $region29
  $region28: #{_lambda_.5} parent=0 // pred_region
    _
  $region29: #{_lambda_.5} parent=0 // pred_fallthru
    _
  // Predicated region
  $region30: #{_lambda_.5} parent=0 // pred_check
    _
  $region31: #{_lambda_.5} parent=0 // pred_check_branch
    %148 = sbr.rel (0) target = $region33
  $region32: #{_lambda_.5} parent=0 // pred_region
    _
  $region33: #{_lambda_.5} parent=0 // pred_fallthru
    _
  // Predicated region
  $region34: #{_lambda_.5} parent=0 // pred_check
    _
  $region35: #{_lambda_.5} parent=0 // pred_check_branch
    %150 = sbr.rel (0) target = $region37
  $region36: #{_lambda_.5} parent=0 // pred_region
    _
  $region37: #{_lambda_.5} parent=0 // pred_fallthru
    _
  // Predicated region
  $region38: #{_lambda_.5} parent=0 // pred_check
    _
  $region39: #{_lambda_.5} parent=0 // pred_check_branch
    %152 = sbr.rel (0) target = $region41
  $region40: #{_lambda_.5} parent=0 // pred_region
    _
  $region41: #{_lambda_.5} parent=0 // pred_fallthru
    _
  // Predicated region
  $region42: #{_lambda_.5} parent=0 // pred_check
    _
  $region43: #{_lambda_.5} parent=0 // pred_check_branch
    %154 = sbr.rel (0) target = $region45
  $region44: #{_lambda_.5} parent=0 // pred_region
    _
  $region45: #{_lambda_.5} parent=0 // pred_fallthru
    _

// kernel: _lambda_.7
$region0: #{_lambda_.7}
  #allocation0 [shape = 'u32[]', space=smem, size = 0x4, offset = 0x4, fixed_abs, tag = 'smem constant byte address 0x4 - core index']
  #allocation1 [shape = 'u32[72,128]{1,0:T(1,128)}', space=vmem, size = 0x9000, scoped, tag = 'internal scratch']
  #allocation2 [shape = 'f32[64,128]{1,0:T(8,128)}', space=vmem, size = 0x8000, scoped, tag = 'scratch operand']
  %s0 = inlined_call_operand.vmem [shape: bf16[64,128], index: 0, kind: input, shape index: {}]
  %s1 = inlined_call_operand.vmem [shape: bf16[128,128], index: 1, kind: input, shape index: {}]
  %s2 = inlined_call_operand.vmem [shape: f32[8,128], index: 2, kind: input, shape index: {}]
  %s3 = inlined_call_operand.vmem [shape: bf16[64,128], index: 3, kind: output, shape index: {0}]
  %s4 = inlined_call_operand.vmem [shape: f32[1,4,16,1], index: 4, kind: output, shape index: {1}]
  %s5 = inlined_call_operand.vmem [shape: f32[1,4,16,1], index: 5, kind: output, shape index: {2}]
  %6 = xla_tuple %s3, %s4, %s5
  %s7 = sld [smem:[#allocation0]]
  $region46: #{_lambda_.7} parent=0
    _
  %s9 = ssub.s32 1, %s7
  %s10 = scalar_select 0, %s9, %s7
  // Predicated region
  $region2: #{_lambda_.7} parent=0 // pred_check
    _
  $region3: #{_lambda_.7} parent=0 // pred_check_branch
    %12 = sbr.rel (0) target = $region5
  $region4: #{_lambda_.7} parent=0 // pred_region
    _
  $region5: #{_lambda_.7} parent=0 // pred_fallthru
    _
  // Predicated region
  $region6: #{_lambda_.7} parent=0 // pred_check
    _
  $region7: #{_lambda_.7} parent=0 // pred_check_branch
    %14 = sbr.rel (0) target = $region9
  $region8: #{_lambda_.7} parent=0 // pred_region
    _
  $region9: #{_lambda_.7} parent=0 // pred_fallthru
    _
  // Predicated region
  $region10: #{_lambda_.7} parent=0 // pred_check
    _
  $region11: #{_lambda_.7} parent=0 // pred_check_branch
    %16 = sbr.rel (0) target = $region13
  $region12: #{_lambda_.7} parent=0 // pred_region
    _
  $region13: #{_lambda_.7} parent=0 // pred_fallthru
    _
  %p17 = scmp.eq.s32.totalorder 0, 0
  // Predicated region
  $region14: #{_lambda_.7} parent=0 // pred_check
    %p18 = pneg %p17
  $region15: #{_lambda_.7} parent=0 // pred_check_branch
    %20 = sbr.rel (%p18) target = $region17
  $region16: #{_lambda_.7} parent=0 // pred_region
    %21 = vst [vmem:[#allocation2] sm:$0xff] 0.0
    %22 = vst [vmem:[#allocation2 + $0x8] sm:$0xff] 0.0
    %23 = vst [vmem:[#allocation2 + $0x10] sm:$0xff] 0.0
    %24 = vst [vmem:[#allocation2 + $0x18] sm:$0xff] 0.0
    %25 = vst [vmem:[#allocation2 + $0x20] sm:$0xff] 0.0
    %26 = vst [vmem:[#allocation2 + $0x28] sm:$0xff] 0.0
    %27 = vst [vmem:[#allocation2 + $0x30] sm:$0xff] 0.0
    %28 = vst [vmem:[#allocation2 + $0x38] sm:$0xff] 0.0
  $region17: #{_lambda_.7} parent=0 // pred_fallthru
    _
  %v29 = vld [vmem:[#allocation2] sm:$0xff]
  %v30 = vld [vmem:[#allocation2 + $0x8] sm:$0xff]
  %v31 = vld [vmem:[#allocation2 + $0x10] sm:$0xff]
  %v32 = vld [vmem:[#allocation2 + $0x18] sm:$0xff]
  %v33 = vld [vmem:[#allocation2 + $0x20] sm:$0xff]
  %v34 = vld [vmem:[#allocation2 + $0x28] sm:$0xff]
  %v35 = vld [vmem:[#allocation2 + $0x30] sm:$0xff]
  %v36 = vld [vmem:[#allocation2 + $0x38] sm:$0xff]
  %v37 = vld [vmem:[%s0] sm:$0xf]
  %v38 = vld [vmem:[%s0 + $0x4] sm:$0xf]
  %v39 = vld [vmem:[%s0 + $0x8] sm:$0xf]
  %v40 = vld [vmem:[%s0 + $0xc] sm:$0xf]
  %v41 = vld [vmem:[%s0 + $0x10] sm:$0xf]
  %v42 = vld [vmem:[%s0 + $0x14] sm:$0xf]
  %v43 = vld [vmem:[%s0 + $0x18] sm:$0xf]
  %v44 = vld [vmem:[%s0 + $0x1c] sm:$0xf]
  %v45 = vld [vmem:[%s1] sm:$0xf]
  %v46 = vld [vmem:[%s1 + $0x4] sm:$0xf]
  %v47 = vld [vmem:[%s1 + $0x8] sm:$0xf]
  %v48 = vld [vmem:[%s1 + $0xc] sm:$0xf]
  %v49 = vld [vmem:[%s1 + $0x10] sm:$0xf]
  %v50 = vld [vmem:[%s1 + $0x14] sm:$0xf]
  %v51 = vld [vmem:[%s1 + $0x18] sm:$0xf]
  %v52 = vld [vmem:[%s1 + $0x1c] sm:$0xf]
  %v53 = vld [vmem:[%s1 + $0x20] sm:$0xf]
  %v54 = vld [vmem:[%s1 + $0x24] sm:$0xf]
  %v55 = vld [vmem:[%s1 + $0x28] sm:$0xf]
  %v56 = vld [vmem:[%s1 + $0x2c] sm:$0xf]
  %v57 = vld [vmem:[%s1 + $0x30] sm:$0xf]
  %v58 = vld [vmem:[%s1 + $0x34] sm:$0xf]
  %v59 = vld [vmem:[%s1 + $0x38] sm:$0xf]
  %v60 = vld [vmem:[%s1 + $0x3c] sm:$0xf]
  %v69 = vunpack.c.l.b16 %v37
  %v70 = vunpack.c.l.b16 %v38
  %v71 = vunpack.c.l.b16 %v39
  %v72 = vunpack.c.l.b16 %v40
  %v73 = vunpack.c.l.b16 %v41
  %v74 = vunpack.c.l.b16 %v42
  %v75 = vunpack.c.l.b16 %v43
  %v76 = vunpack.c.l.b16 %v44
  %v77 = vpack.c.b16 %v70, %v69
  %v78 = vpack.c.b16 %v72, %v71
  %v79 = vpack.c.b16 %v74, %v73
  %v80 = vpack.c.b16 %v76, %v75
  %v101 = vunpack.c.l.b16 %v45
  %v102 = vunpack.c.l.b16 %v46
  %v103 = vunpack.c.l.b16 %v47
  %v104 = vunpack.c.l.b16 %v48
  %v105 = vunpack.c.l.b16 %v49
  %v106 = vunpack.c.l.b16 %v50
  %v107 = vunpack.c.l.b16 %v51
  %v108 = vunpack.c.l.b16 %v52
  %v109 = vunpack.c.l.b16 %v53
  %v110 = vunpack.c.l.b16 %v54
  %v111 = vunpack.c.l.b16 %v55
  %v112 = vunpack.c.l.b16 %v56
  %v113 = vunpack.c.l.b16 %v57
  %v114 = vunpack.c.l.b16 %v58
  %v115 = vunpack.c.l.b16 %v59
  %v116 = vunpack.c.l.b16 %v60
  %v117 = vpack.c.b16 %v102, %v101
  %v118 = vpack.c.b16 %v104, %v103
  %v119 = vpack.c.b16 %v106, %v105
  %v120 = vpack.c.b16 %v108, %v107
  %v121 = vpack.c.b16 %v110, %v109
  %v122 = vpack.c.b16 %v112, %v111
  %v123 = vpack.c.b16 %v114, %v113
  %v124 = vpack.c.b16 %v116, %v115
  %133 = vmatpush.bf16.msra.mxu0 %v124
  %134 = vmatpush.bf16.msra.mxu0 %v123
  %135 = vmatpush.bf16.msra.mxu0 %v122
  %136 = vmatpush.bf16.msra.mxu0 %v121
  %137 = vmatpush.bf16.msra.mxu0 %v120
  %138 = vmatpush.bf16.msra.mxu0 %v119
  %139 = vmatpush.bf16.msra.mxu0 %v118
  %140 = vmatpush.bf16.msra.mxu0 %v117
  %141 = vmatmul.bf16.gmra.mxu0 %v77
  %v142 = vpop.f32.mrf.mxu0
  %v143 = vadd.f32 0.0, %v142
  %v144 = vpop.f32.mrf.mxu0
  %v145 = vadd.f32 0.0, %v144
  %146 = vmatmul.bf16.gmra.mxu0 %v78
  %v147 = vpop.f32.mrf.mxu0
  %v148 = vadd.f32 0.0, %v147
  %v149 = vpop.f32.mrf.mxu0
  %v150 = vadd.f32 0.0, %v149
  %151 = vmatmul.bf16.gmra.mxu0 %v79
  %v152 = vpop.f32.mrf.mxu0
  %v153 = vadd.f32 0.0, %v152
  %v154 = vpop.f32.mrf.mxu0
  %v155 = vadd.f32 0.0, %v154
  %156 = vmatmul.bf16.gmra.mxu0 %v80
  %v157 = vpop.f32.mrf.mxu0
  %v158 = vadd.f32 0.0, %v157
  %v159 = vpop.f32.mrf.mxu0
  %v160 = vadd.f32 0.0, %v159
  %161 = vdwg.mxu0
  %v162 = vadd.f32 %v29, %v143
  %v163 = vadd.f32 %v30, %v145
  %v164 = vadd.f32 %v31, %v148
  %v165 = vadd.f32 %v32, %v150
  %v166 = vadd.f32 %v33, %v153
  %v167 = vadd.f32 %v34, %v155
  %v168 = vadd.f32 %v35, %v158
  %v169 = vadd.f32 %v36, %v160
  %170 = vst [vmem:[#allocation2] sm:$0xff] %v162
  %171 = vst [vmem:[#allocation2 + $0x8] sm:$0xff] %v163
  %172 = vst [vmem:[#allocation2 + $0x10] sm:$0xff] %v164
  %173 = vst [vmem:[#allocation2 + $0x18] sm:$0xff] %v165
  %174 = vst [vmem:[#allocation2 + $0x20] sm:$0xff] %v166
  %175 = vst [vmem:[#allocation2 + $0x28] sm:$0xff] %v167
  %176 = vst [vmem:[#allocation2 + $0x30] sm:$0xff] %v168
  %177 = vst [vmem:[#allocation2 + $0x38] sm:$0xff] %v169
  // Predicated region
  $region18: #{_lambda_.7} parent=0 // pred_check
    %p178 = pneg %p17
  $region19: #{_lambda_.7} parent=0 // pred_check_branch
    %180 = sbr.rel (%p178) target = $region21
  $region20: #{_lambda_.7} parent=0 // pred_region
    %v181 = vld [vmem:[#allocation2] sm:$0xff]
    %v182 = vld [vmem:[#allocation2 + $0x8] sm:$0xff]
    %v183 = vld [vmem:[#allocation2 + $0x10] sm:$0xff]
    %v184 = vld [vmem:[#allocation2 + $0x18] sm:$0xff]
    %v185 = vld [vmem:[#allocation2 + $0x20] sm:$0xff]
    %v186 = vld [vmem:[#allocation2 + $0x28] sm:$0xff]
    %v187 = vld [vmem:[#allocation2 + $0x30] sm:$0xff]
    %v188 = vld [vmem:[#allocation2 + $0x38] sm:$0xff]
    %v189 = vpack.c.bf16 %v181, %v181
    %v190 = vpack.c.bf16 %v182, %v182
    %v191 = vpack.c.bf16 %v183, %v183
    %v192 = vpack.c.bf16 %v184, %v184
    %v193 = vpack.c.bf16 %v185, %v185
    %v194 = vpack.c.bf16 %v186, %v186
    %v195 = vpack.c.bf16 %v187, %v187
    %v196 = vpack.c.bf16 %v188, %v188
    %197 = vst [vmem:[%s3] sm:$0xf] %v189
    %198 = vst [vmem:[%s3 + $0x4] sm:$0xf] %v190
    %199 = vst [vmem:[%s3 + $0x8] sm:$0xf] %v191
    %200 = vst [vmem:[%s3 + $0xc] sm:$0xf] %v192
    %201 = vst [vmem:[%s3 + $0x10] sm:$0xf] %v193
    %202 = vst [vmem:[%s3 + $0x14] sm:$0xf] %v194
    %203 = vst [vmem:[%s3 + $0x18] sm:$0xf] %v195
    %204 = vst [vmem:[%s3 + $0x1c] sm:$0xf] %v196
    %v205 = vld [vmem:[%s2] sm:$0xff]
    %v206 = vperm.slane %v205, 0
    %v207 = vmul.f32 %v181, %v206
    %v208 = vmul.f32 %v182, %v206
    %209 = vadd.xlane.f32.xlu0 %v207
    %v210 = vpop.xlane.xlu0 %209
    %211 = vadd.xlane.f32.xlu0 %v208
    %v212 = vpop.xlane.xlu0 %211
    %vm213 = vcmask 7168
    %214 = vst.msk [vmem:[%s4] sm:$0xff] %vm213, %v210
    %215 = vst.msk [vmem:[%s4 + $0x8] sm:$0xff] %vm213, %v212
    %v216 = vmul.f32 %v207, %v181
    %v217 = vmul.f32 %v208, %v182
    %218 = vadd.xlane.f32.xlu0 %v216
    %v219 = vpop.xlane.xlu0 %218
    %220 = vadd.xlane.f32.xlu0 %v217
    %v221 = vpop.xlane.xlu0 %220
    %222 = vst.msk [vmem:[%s5] sm:$0xff] %vm213, %v219
    %223 = vst.msk [vmem:[%s5 + $0x8] sm:$0xff] %vm213, %v221
    %v224 = vperm.slane %v205, 1
    %v225 = vmul.f32 %v183, %v224
    %v226 = vmul.f32 %v184, %v224
    %227 = vadd.xlane.f32.xlu0 %v225
    %v228 = vpop.xlane.xlu0 %227
    %229 = vadd.xlane.f32.xlu0 %v226
    %v230 = vpop.xlane.xlu0 %229
    %s231 = scalar_lea.vmem %s4, 16
    %232 = vst.msk [vmem:[%s231] sm:$0xff] %vm213, %v228
    %233 = vst.msk [vmem:[%s231 + $0x8] sm:$0xff] %vm213, %v230
    %v234 = vmul.f32 %v225, %v183
    %v235 = vmul.f32 %v226, %v184
    %236 = vadd.xlane.f32.xlu0 %v234
    %v237 = vpop.xlane.xlu0 %236
    %238 = vadd.xlane.f32.xlu0 %v235
    %v239 = vpop.xlane.xlu0 %238
    %s240 = scalar_lea.vmem %s5, 16
    %241 = vst.msk [vmem:[%s240] sm:$0xff] %vm213, %v237
    %242 = vst.msk [vmem:[%s240 + $0x8] sm:$0xff] %vm213, %v239
    %v243 = vperm.slane %v205, 2
    %v244 = vmul.f32 %v185, %v243
    %v245 = vmul.f32 %v186, %v243
    %246 = vadd.xlane.f32.xlu0 %v244
    %v247 = vpop.xlane.xlu0 %246
    %248 = vadd.xlane.f32.xlu0 %v245
    %v249 = vpop.xlane.xlu0 %248
    %s250 = scalar_lea.vmem %s4, 32
    %251 = vst.msk [vmem:[%s250] sm:$0xff] %vm213, %v247
    %252 = vst.msk [vmem:[%s250 + $0x8] sm:$0xff] %vm213, %v249
    %v253 = vmul.f32 %v244, %v185
    %v254 = vmul.f32 %v245, %v186
    %255 = vadd.xlane.f32.xlu0 %v253
    %v256 = vpop.xlane.xlu0 %255
    %257 = vadd.xlane.f32.xlu0 %v254
    %v258 = vpop.xlane.xlu0 %257
    %s259 = scalar_lea.vmem %s5, 32
    %260 = vst.msk [vmem:[%s259] sm:$0xff] %vm213, %v256
    %261 = vst.msk [vmem:[%s259 + $0x8] sm:$0xff] %vm213, %v258
    %v262 = vperm.slane %v205, 3
    %v263 = vmul.f32 %v187, %v262
    %v264 = vmul.f32 %v188, %v262
    %265 = vadd.xlane.f32.xlu0 %v263
    %v266 = vpop.xlane.xlu0 %265
    %267 = vadd.xlane.f32.xlu0 %v264
    %v268 = vpop.xlane.xlu0 %267
    %s269 = scalar_lea.vmem %s4, 48
    %270 = vst.msk [vmem:[%s269] sm:$0xff] %vm213, %v266
    %271 = vst.msk [vmem:[%s269 + $0x8] sm:$0xff] %vm213, %v268
    %v272 = vmul.f32 %v263, %v187
    %v273 = vmul.f32 %v264, %v188
    %274 = vadd.xlane.f32.xlu0 %v272
    %v275 = vpop.xlane.xlu0 %274
    %276 = vadd.xlane.f32.xlu0 %v273
    %v277 = vpop.xlane.xlu0 %276
    %s278 = scalar_lea.vmem %s5, 48
    %279 = vst.msk [vmem:[%s278] sm:$0xff] %vm213, %v275
    %280 = vst.msk [vmem:[%s278 + $0x8] sm:$0xff] %vm213, %v277
  $region21: #{_lambda_.7} parent=0 // pred_fallthru
    _
  // Predicated region
  $region22: #{_lambda_.7} parent=0 // pred_check
    _
  $region23: #{_lambda_.7} parent=0 // pred_check_branch
    %282 = sbr.rel (0) target = $region25
  $region24: #{_lambda_.7} parent=0 // pred_region
    _
  $region25: #{_lambda_.7} parent=0 // pred_fallthru
    _
  // Predicated region
  $region26: #{_lambda_.7} parent=0 // pred_check
    _
  $region27: #{_lambda_.7} parent=0 // pred_check_branch
    %284 = sbr.rel (0) target = $region29
  $region28: #{_lambda_.7} parent=0 // pred_region
    _
  $region29: #{_lambda_.7} parent=0 // pred_fallthru
    _
  // Predicated region
  $region30: #{_lambda_.7} parent=0 // pred_check
    _
  $region31: #{_lambda_.7} parent=0 // pred_check_branch
    %286 = sbr.rel (0) target = $region33
  $region32: #{_lambda_.7} parent=0 // pred_region
    _
  $region33: #{_lambda_.7} parent=0 // pred_fallthru
    _
  // Predicated region
  $region34: #{_lambda_.7} parent=0 // pred_check
    _
  $region35: #{_lambda_.7} parent=0 // pred_check_branch
    %288 = sbr.rel (0) target = $region37
  $region36: #{_lambda_.7} parent=0 // pred_region
    _
  $region37: #{_lambda_.7} parent=0 // pred_fallthru
    _
  // Predicated region
  $region38: #{_lambda_.7} parent=0 // pred_check
    _
  $region39: #{_lambda_.7} parent=0 // pred_check_branch
    %290 = sbr.rel (0) target = $region41
  $region40: #{_lambda_.7} parent=0 // pred_region
    _
  $region41: #{_lambda_.7} parent=0 // pred_fallthru
    _
  // Predicated region
  $region42: #{_lambda_.7} parent=0 // pred_check
    _
  $region43: #{_lambda_.7} parent=0 // pred_check_branch
    %292 = sbr.rel (0) target = $region45
  $region44: #{_lambda_.7} parent=0 // pred_region
    _
  $region45: #{_lambda_.7} parent=0 // pred_fallthru
    _

// kernel: _lambda_.8
$region0: #{_lambda_.8}
  #allocation0 [shape = 'u32[]', space=smem, size = 0x4, offset = 0x4, fixed_abs, tag = 'smem constant byte address 0x4 - core index']
  #allocation1 [shape = 'u32[72,128]{1,0:T(1,128)}', space=vmem, size = 0x9000, scoped, tag = 'internal scratch']
  %s0 = inlined_call_operand.vmem [shape: bf16[64,128], index: 0, kind: input, shape index: {}]
  %s1 = inlined_call_operand.vmem [shape: f32[64,1], index: 1, kind: input, shape index: {}]
  %s2 = inlined_call_operand.vmem [shape: f32[64,1], index: 2, kind: input, shape index: {}]
  %s3 = inlined_call_operand.vmem [shape: bf16[64,128], index: 3, kind: output, shape index: {}]
  %s4 = sld [smem:[#allocation0]]
  $region22: #{_lambda_.8} parent=0
    _
  %s6 = ssub.s32 1, %s4
  %s7 = scalar_select 0, %s6, %s4
  // Predicated region
  $region2: #{_lambda_.8} parent=0 // pred_check
    _
  $region3: #{_lambda_.8} parent=0 // pred_check_branch
    %9 = sbr.rel (0) target = $region5
  $region4: #{_lambda_.8} parent=0 // pred_region
    _
  $region5: #{_lambda_.8} parent=0 // pred_fallthru
    _
  // Predicated region
  $region6: #{_lambda_.8} parent=0 // pred_check
    _
  $region7: #{_lambda_.8} parent=0 // pred_check_branch
    %11 = sbr.rel (0) target = $region9
  $region8: #{_lambda_.8} parent=0 // pred_region
    _
  $region9: #{_lambda_.8} parent=0 // pred_fallthru
    _
  // Predicated region
  $region10: #{_lambda_.8} parent=0 // pred_check
    _
  $region11: #{_lambda_.8} parent=0 // pred_check_branch
    %13 = sbr.rel (0) target = $region13
  $region12: #{_lambda_.8} parent=0 // pred_region
    _
  $region13: #{_lambda_.8} parent=0 // pred_fallthru
    _
  %v14 = vld [vmem:[%s0] sm:$0xf]
  %v15 = vld [vmem:[%s0 + $0x4] sm:$0xf]
  %v16 = vld [vmem:[%s0 + $0x8] sm:$0xf]
  %v17 = vld [vmem:[%s0 + $0xc] sm:$0xf]
  %v18 = vld [vmem:[%s0 + $0x10] sm:$0xf]
  %v19 = vld [vmem:[%s0 + $0x14] sm:$0xf]
  %v20 = vld [vmem:[%s0 + $0x18] sm:$0xf]
  %v21 = vld [vmem:[%s0 + $0x1c] sm:$0xf]
  %v22 = vunpack.c.l.bf16 %v14
  %v23 = vunpack.c.l.bf16 %v15
  %v24 = vunpack.c.l.bf16 %v16
  %v25 = vunpack.c.l.bf16 %v17
  %v26 = vunpack.c.l.bf16 %v18
  %v27 = vunpack.c.l.bf16 %v19
  %v28 = vunpack.c.l.bf16 %v20
  %v29 = vunpack.c.l.bf16 %v21
  %v30 = vld [vmem:[%s1] sm:$0xff]
  %v31 = vld [vmem:[%s1 + $0x8] sm:$0xff]
  %v32 = vld [vmem:[%s1 + $0x10] sm:$0xff]
  %v33 = vld [vmem:[%s1 + $0x18] sm:$0xff]
  %v34 = vld [vmem:[%s1 + $0x20] sm:$0xff]
  %v35 = vld [vmem:[%s1 + $0x28] sm:$0xff]
  %v36 = vld [vmem:[%s1 + $0x30] sm:$0xff]
  %v37 = vld [vmem:[%s1 + $0x38] sm:$0xff]
  %39 = vset.pattern.permute.xlu0 0
  %40 = vperm.xlu0 %39, %v30
  %v41 = vpop.permute.xlu0 %40
  %44 = vset.pattern.permute.xlu0 0
  %45 = vperm.xlu0 %44, %v31
  %v46 = vpop.permute.xlu0 %45
  %49 = vset.pattern.permute.xlu0 0
  %50 = vperm.xlu0 %49, %v32
  %v51 = vpop.permute.xlu0 %50
  %54 = vset.pattern.permute.xlu0 0
  %55 = vperm.xlu0 %54, %v33
  %v56 = vpop.permute.xlu0 %55
  %59 = vset.pattern.permute.xlu0 0
  %60 = vperm.xlu0 %59, %v34
  %v61 = vpop.permute.xlu0 %60
  %64 = vset.pattern.permute.xlu0 0
  %65 = vperm.xlu0 %64, %v35
  %v66 = vpop.permute.xlu0 %65
  %69 = vset.pattern.permute.xlu0 0
  %70 = vperm.xlu0 %69, %v36
  %v71 = vpop.permute.xlu0 %70
  %74 = vset.pattern.permute.xlu0 0
  %75 = vperm.xlu0 %74, %v37
  %v76 = vpop.permute.xlu0 %75
  %v78 = vmul.f32 %v22, %v41
  %v79 = vmul.f32 %v23, %v46
  %v80 = vmul.f32 %v24, %v51
  %v81 = vmul.f32 %v25, %v56
  %v82 = vmul.f32 %v26, %v61
  %v83 = vmul.f32 %v27, %v66
  %v84 = vmul.f32 %v28, %v71
  %v85 = vmul.f32 %v29, %v76
  %v86 = vld [vmem:[%s2] sm:$0xff]
  %v87 = vld [vmem:[%s2 + $0x8] sm:$0xff]
  %v88 = vld [vmem:[%s2 + $0x10] sm:$0xff]
  %v89 = vld [vmem:[%s2 + $0x18] sm:$0xff]
  %v90 = vld [vmem:[%s2 + $0x20] sm:$0xff]
  %v91 = vld [vmem:[%s2 + $0x28] sm:$0xff]
  %v92 = vld [vmem:[%s2 + $0x30] sm:$0xff]
  %v93 = vld [vmem:[%s2 + $0x38] sm:$0xff]
  %95 = vset.pattern.permute.xlu0 0
  %96 = vperm.xlu0 %95, %v86
  %v97 = vpop.permute.xlu0 %96
  %100 = vset.pattern.permute.xlu0 0
  %101 = vperm.xlu0 %100, %v87
  %v102 = vpop.permute.xlu0 %101
  %105 = vset.pattern.permute.xlu0 0
  %106 = vperm.xlu0 %105, %v88
  %v107 = vpop.permute.xlu0 %106
  %110 = vset.pattern.permute.xlu0 0
  %111 = vperm.xlu0 %110, %v89
  %v112 = vpop.permute.xlu0 %111
  %115 = vset.pattern.permute.xlu0 0
  %116 = vperm.xlu0 %115, %v90
  %v117 = vpop.permute.xlu0 %116
  %120 = vset.pattern.permute.xlu0 0
  %121 = vperm.xlu0 %120, %v91
  %v122 = vpop.permute.xlu0 %121
  %125 = vset.pattern.permute.xlu0 0
  %126 = vperm.xlu0 %125, %v92
  %v127 = vpop.permute.xlu0 %126
  %130 = vset.pattern.permute.xlu0 0
  %131 = vperm.xlu0 %130, %v93
  %v132 = vpop.permute.xlu0 %131
  %v134 = vadd.f32 %v78, %v97
  %v135 = vadd.f32 %v79, %v102
  %v136 = vadd.f32 %v80, %v107
  %v137 = vadd.f32 %v81, %v112
  %v138 = vadd.f32 %v82, %v117
  %v139 = vadd.f32 %v83, %v122
  %v140 = vadd.f32 %v84, %v127
  %v141 = vadd.f32 %v85, %v132
  %v142 = vmax.f32 %v134, 0.0
  %v143 = vmax.f32 %v135, 0.0
  %v144 = vmax.f32 %v136, 0.0
  %v145 = vmax.f32 %v137, 0.0
  %v146 = vmax.f32 %v138, 0.0
  %v147 = vmax.f32 %v139, 0.0
  %v148 = vmax.f32 %v140, 0.0
  %v149 = vmax.f32 %v141, 0.0
  %v150 = vpack.c.bf16 %v142, %v142
  %v151 = vpack.c.bf16 %v143, %v143
  %v152 = vpack.c.bf16 %v144, %v144
  %v153 = vpack.c.bf16 %v145, %v145
  %v154 = vpack.c.bf16 %v146, %v146
  %v155 = vpack.c.bf16 %v147, %v147
  %v156 = vpack.c.bf16 %v148, %v148
  %v157 = vpack.c.bf16 %v149, %v149
  %158 = vst [vmem:[%s3] sm:$0xf] %v150
  %159 = vst [vmem:[%s3 + $0x4] sm:$0xf] %v151
  %160 = vst [vmem:[%s3 + $0x8] sm:$0xf] %v152
  %161 = vst [vmem:[%s3 + $0xc] sm:$0xf] %v153
  %162 = vst [vmem:[%s3 + $0x10] sm:$0xf] %v154
  %163 = vst [vmem:[%s3 + $0x14] sm:$0xf] %v155
  %164 = vst [vmem:[%s3 + $0x18] sm:$0xf] %v156
  %165 = vst [vmem:[%s3 + $0x1c] sm:$0xf] %v157
  // Predicated region
  $region14: #{_lambda_.8} parent=0 // pred_check
    _
  $region15: #{_lambda_.8} parent=0 // pred_check_branch
    %167 = sbr.rel (0) target = $region17
  $region16: #{_lambda_.8} parent=0 // pred_region
    _
  $region17: #{_lambda_.8} parent=0 // pred_fallthru
    _
  // Predicated region
  $region18: #{_lambda_.8} parent=0 // pred_check
    _
  $region19: #{_lambda_.8} parent=0 // pred_check_branch
    %169 = sbr.rel (0) target = $region21
  $region20: #{_lambda_.8} parent=0 // pred_region
    _
  $region21: #{_lambda_.8} parent=0 // pred_fallthru
    _

// kernel: _lambda_.9
$region0: #{_lambda_.9}
  #allocation0 [shape = 'u32[]', space=smem, size = 0x4, offset = 0x4, fixed_abs, tag = 'smem constant byte address 0x4 - core index']
  #allocation1 [shape = 'u32[72,128]{1,0:T(1,128)}', space=vmem, size = 0x9000, scoped, tag = 'internal scratch']
  #allocation2 [shape = 'f32[64,128]{1,0:T(8,128)}', space=vmem, size = 0x8000, scoped, tag = 'scratch operand']
  %s0 = inlined_call_operand.vmem [shape: bf16[64,128], index: 0, kind: input, shape index: {}]
  %s1 = inlined_call_operand.vmem [shape: bf16[128,256], index: 1, kind: input, shape index: {}]
  %s2 = inlined_call_operand.vmem [shape: f32[64,256], index: 2, kind: output, shape index: {}]
  %s3 = sld [smem:[#allocation0]]
  $region124: #{_lambda_.9} parent=0
    _
  %s5 = ssub.s32 1, %s3
  %s6 = scalar_select 0, %s5, %s3
  $region1: #{_lambda_.9} parent=0
    #allocation3 [shape = 'u8[65536]{0}', space=vmem, size = 0x10000, scoped, tag = 'input window, operand 1']
    #allocation4 [shape = 'u8[65536]{0}', space=vmem, size = 0x10000, scoped, tag = 'output window, operand 0']
    loop: start=0, step=1, limit=4
    $region2: #{_lambda_.9} parent=1 // loop_pre_header
      _
    $region3: #{_lambda_.9} parent=1 // loop_header
      %s8 = sphi 0, %s12
      %p9 = scmp.ge.s32.totalorder %s8, 4
      %s15 = sphi 0, %s27
      %s16 = sphi 0, %s23
      %s17 = sphi 0, %s15
      %s18 = sphi 0, %s16
      %s19 = sphi 0, %s17
      %s20 = sphi 0, %s18
      %s30 = sphi 0, %s32
      %s33 = sphi 0, %s30
      %s34 = sphi 0, %s33
      %s50 = sphi 0, %s34
      %s58 = sphi 0, %s60
      %s61 = sphi 0, %s58
      %s62 = sphi 0, %s61
      %s78 = sphi 0, %s62
      %s84 = sphi 0, %s86
      %s87 = sphi 0, %s84
      %s88 = sphi 0, %s87
      %s104 = sphi 0, %s88
    $region4: #{_lambda_.9} parent=1 // loop_header_branch
      %11 = sbr.rel (%p9) target = $region8
    $region5: #{_lambda_.9} parent=1 // loop_body
      %s13 = ssub.s32 %s8, 1
      %s14 = ssub.s32 %s8, 2
      %s21 = sadd.s32 1, %s16
      %p22 = scmp.ge.s32.totalorder %s21, 1
      %s23 = scalar_select %p22, 0, %s21
      %s24 = sadd.s32 1, %s15
      %s25 = scalar_select %p22, %s24, %s15
      %p26 = scmp.ge.s32.totalorder %s25, 2
      %s27 = scalar_select %p26, 0, %s25
      %s28 = ssub.s32 %s16, %s23
      %p29 = scmp.eq.s32.totalorder %s28, 0
      %s31 = sadd.s32 %s30, 1
      %s32 = scalar_select %p29, %s30, %s31
      %p35 = pneg %p29
      %p36 = scmp.eq.s32.totalorder %s8, 1
      %p37 = por %p35, %p36
      %p38 = scmp.ne.s32.totalorder %s30, %s33
      %p39 = scmp.eq.s32.totalorder %s8, 0
      %p40 = por %p38, %p39
      %p41 = scmp.ne.s32.totalorder %s30, %s33
      %p42 = scmp.eq.s32.totalorder %s13, 1
      %p43 = por %p41, %p42
      %p44 = scmp.ne.s32.totalorder %s33, %s34
      %p45 = scmp.eq.s32.totalorder %s13, 0
      %p46 = por %p44, %p45
      %p47 = scmp.ne.s32.totalorder %s33, %s34
      %p48 = scmp.eq.s32.totalorder %s14, 1
      %p49 = por %p47, %p48
      %p51 = scmp.ne.s32.totalorder %s34, %s50
      %p52 = scmp.eq.s32.totalorder %s14, 0
      %p53 = por %p51, %p52
      %s54 = ssub.s32 %s16, %s23
      %s55 = ssub.s32 %s15, %s27
      %s56 = sor.u32 %s54, %s55
      %p57 = scmp.eq.s32.totalorder %s56, 0
      %s59 = sadd.s32 %s58, 1
      %s60 = scalar_select %p57, %s58, %s59
      %p63 = pneg %p57
      %p64 = scmp.eq.s32.totalorder %s8, 1
      %p65 = por %p63, %p64
      %p66 = scmp.ne.s32.totalorder %s58, %s61
      %p67 = scmp.eq.s32.totalorder %s8, 0
      %p68 = por %p66, %p67
      %p69 = scmp.ne.s32.totalorder %s58, %s61
      %p70 = scmp.eq.s32.totalorder %s13, 1
      %p71 = por %p69, %p70
      %p72 = scmp.ne.s32.totalorder %s61, %s62
      %p73 = scmp.eq.s32.totalorder %s13, 0
      %p74 = por %p72, %p73
      %p75 = scmp.ne.s32.totalorder %s61, %s62
      %p76 = scmp.eq.s32.totalorder %s14, 1
      %p77 = por %p75, %p76
      %p79 = scmp.ne.s32.totalorder %s62, %s78
      %p80 = scmp.eq.s32.totalorder %s14, 0
      %p81 = por %p79, %p80
      %s82 = ssub.s32 %s15, %s27
      %p83 = scmp.eq.s32.totalorder %s82, 0
      %s85 = sadd.s32 %s84, 1
      %s86 = scalar_select %p83, %s84, %s85
      %p89 = pneg %p83
      %p90 = scmp.eq.s32.totalorder %s8, 1
      %p91 = por %p89, %p90
      %p92 = scmp.ne.s32.totalorder %s84, %s87
      %p93 = scmp.eq.s32.totalorder %s8, 0
      %p94 = por %p92, %p93
      %p95 = scmp.ne.s32.totalorder %s84, %s87
      %p96 = scmp.eq.s32.totalorder %s13, 1
      %p97 = por %p95, %p96
      %p98 = scmp.ne.s32.totalorder %s87, %s88
      %p99 = scmp.eq.s32.totalorder %s13, 0
      %p100 = por %p98, %p99
      %p101 = scmp.ne.s32.totalorder %s87, %s88
      %p102 = scmp.eq.s32.totalorder %s14, 1
      %p103 = por %p101, %p102
      %p105 = scmp.ne.s32.totalorder %s88, %s104
      %p106 = scmp.eq.s32.totalorder %s14, 0
      %p107 = por %p105, %p106
      %p108 = scmp.le.s32.totalorder 1, %s8
      %p109 = scmp.lt.s32.totalorder %s8, 3
      %p110 = pnand %p108, %p109
      %p111 = pneg %p110
      // Predicated region
      $region9: #{_lambda_.9} parent=5 // pred_check
        _
      $region10: #{_lambda_.9} parent=5 // pred_check_branch
        %113 = sbr.rel (%p110) target = $region12
      $region11: #{_lambda_.9} parent=5 // pred_region
        %s114 = ssub.s32 %s8, 1
        // Predicated region
        $region13: #{_lambda_.9} parent=11 // pred_check
          %p115 = pneg %p46
        $region14: #{_lambda_.9} parent=11 // pred_check_branch
          %117 = sbr.rel (%p115) target = $region16
        $region15: #{_lambda_.9} parent=11 // pred_region
          %p118 = scmp.lt.s32.totalorder %s18, 0
          %s119 = scalar_select %p118, %s18, 0
          %s120 = smul.addr %s119, 4
          %s121 = scalar_lea.vmem %s0, %s120
        $region16: #{_lambda_.9} parent=11 // pred_fallthru
          _
      $region12: #{_lambda_.9} parent=5 // pred_fallthru
        _
      %p122 = scmp.lt.s32.totalorder %s8, 2
      // Predicated region
      $region17: #{_lambda_.9} parent=5 // pred_check
        %p123 = pneg %p122
      $region18: #{_lambda_.9} parent=5 // pred_check_branch
        %125 = sbr.rel (%p123) target = $region20
      $region19: #{_lambda_.9} parent=5 // pred_region
        // Predicated region
        $region21: #{_lambda_.9} parent=19 // pred_check
          %p126 = pneg %p68
        $region22: #{_lambda_.9} parent=19 // pred_check_branch
          %128 = sbr.rel (%p126) target = $region24
        $region23: #{_lambda_.9} parent=19 // pred_region
          %s129 = sand.u32 %s58, 1
          %s130 = sand.u32 %s58, 1
          %s131 = smul.addr %s130, 64
          %s132 = scalar_lea.vmem [#allocation3], %s131
          %s133 = smul.u32 16, %s16
          %s134 = smul.addr %s133, 2
          %s135 = sadd.s32 %s15, %s134
          %s136 = smul.addr %s135, 4
          %s137 = scalar_lea.vmem %s1, %s136
          // Predicated region
          $region25: #{_lambda_.9} parent=23 // pred_check
            _
          $region26: #{_lambda_.9} parent=23 // pred_check_branch
            %139 = sbr.rel (0) target = $region28
          $region27: #{_lambda_.9} parent=23 // pred_region
            // Predicated region
            $region29: #{_lambda_.9} parent=27 // pred_check
              _
            $region30: #{_lambda_.9} parent=27 // pred_check_branch
              %141 = sbr.rel target = $region32
            $region31: #{_lambda_.9} parent=27 // pred_region
              // Predicated region
              $region44: #{_lambda_.9} parent=31 // pred_check
                _
              $region45: #{_lambda_.9} parent=31 // pred_check_branch
                %187 = sbr.rel (0) target = $region47
              $region46: #{_lambda_.9} parent=31 // pred_region
                loop: start=0, step=1, limit=1
                $region48: #{_lambda_.9} parent=46 // loop_pre_header
                  _
                $region49: #{_lambda_.9} parent=46 // loop_header
                  %s189 = sphi 0, %s193
                  %p190 = scmp.ge.s32.totalorder %s189, 1
                  %s194 = sphi %s137, %s137
                  %s195 = sphi %s132, %s132
                $region50: #{_lambda_.9} parent=46 // loop_header_branch
                  %192 = sbr.rel (%p190) target = $region54
                $region51: #{_lambda_.9} parent=46 // loop_body
                  _
                $region52: #{_lambda_.9} parent=46 // loop_footer
                  %s193 = sadd.s32 1, %s189
                $region53: #{_lambda_.9} parent=46 // loop_footer_branch
                  %188 = sbr.rel target = $region49
                $region54: #{_lambda_.9} parent=46 // loop_exit
                  _
                %s197 = ssub.s32 16, 1
                loop: start=0, step=1, limit=1
                $region55: #{_lambda_.9} parent=46 // loop_pre_header
                  _
                $region56: #{_lambda_.9} parent=46 // loop_header
                  %s199 = sphi 0, %s203
                  %p200 = scmp.ge.s32.totalorder %s199, 1
                  %s204 = sphi %s137, %s137
                  %s205 = sphi %s132, %s132
                $region57: #{_lambda_.9} parent=46 // loop_header_branch
                  %202 = sbr.rel (%p200) target = $region61
                $region58: #{_lambda_.9} parent=46 // loop_body
                  %v206 = vld [vmem:[%s204] sm:%s197]
                  %207 = vst [vmem:[%s205] sm:%s197] %v206
                  %v208 = vld [vmem:[%s204 + $0x8] sm:%s197]
                  %209 = vst [vmem:[%s205 + $0x4] sm:%s197] %v208
                  %v210 = vld [vmem:[%s204 + $0x10] sm:%s197]
                  %211 = vst [vmem:[%s205 + $0x8] sm:%s197] %v210
                  %v212 = vld [vmem:[%s204 + $0x18] sm:%s197]
                  %213 = vst [vmem:[%s205 + $0xc] sm:%s197] %v212
                  %v214 = vld [vmem:[%s204 + $0x20] sm:%s197]
                  %215 = vst [vmem:[%s205 + $0x10] sm:%s197] %v214
                  %v216 = vld [vmem:[%s204 + $0x28] sm:%s197]
                  %217 = vst [vmem:[%s205 + $0x14] sm:%s197] %v216
                  %v218 = vld [vmem:[%s204 + $0x30] sm:%s197]
                  %219 = vst [vmem:[%s205 + $0x18] sm:%s197] %v218
                  %v220 = vld [vmem:[%s204 + $0x38] sm:%s197]
                  %221 = vst [vmem:[%s205 + $0x1c] sm:%s197] %v220
                  %v222 = vld [vmem:[%s204 + $0x40] sm:%s197]
                  %223 = vst [vmem:[%s205 + $0x20] sm:%s197] %v222
                  %v224 = vld [vmem:[%s204 + $0x48] sm:%s197]
                  %225 = vst [vmem:[%s205 + $0x24] sm:%s197] %v224
                  %v226 = vld [vmem:[%s204 + $0x50] sm:%s197]
                  %227 = vst [vmem:[%s205 + $0x28] sm:%s197] %v226
                  %v228 = vld [vmem:[%s204 + $0x58] sm:%s197]
                  %229 = vst [vmem:[%s205 + $0x2c] sm:%s197] %v228
                  %v230 = vld [vmem:[%s204 + $0x60] sm:%s197]
                  %231 = vst [vmem:[%s205 + $0x30] sm:%s197] %v230
                  %v232 = vld [vmem:[%s204 + $0x68] sm:%s197]
                  %233 = vst [vmem:[%s205 + $0x34] sm:%s197] %v232
                  %v234 = vld [vmem:[%s204 + $0x70] sm:%s197]
                  %235 = vst [vmem:[%s205 + $0x38] sm:%s197] %v234
                  %v236 = vld [vmem:[%s204 + $0x78] sm:%s197]
                  %237 = vst [vmem:[%s205 + $0x3c] sm:%s197] %v236
                $region59: #{_lambda_.9} parent=46 // loop_footer
                  %s203 = sadd.s32 1, %s199
                $region60: #{_lambda_.9} parent=46 // loop_footer_branch
                  %198 = sbr.rel target = $region56
                $region61: #{_lambda_.9} parent=46 // loop_exit
                  _
              $region47: #{_lambda_.9} parent=31 // pred_fallthru
                _
            $region32: #{_lambda_.9} parent=27 // pred_fallthru
              _
            // Predicated region
            $region33: #{_lambda_.9} parent=27 // pred_check
              _
            $region34: #{_lambda_.9} parent=27 // pred_check_branch
              %143 = sbr.rel (0) target = $region36
            $region35: #{_lambda_.9} parent=27 // pred_region
              %s145 = ssub.s32 16, 1
              loop: start=0, step=1, limit=1
              $region37: #{_lambda_.9} parent=35 // loop_pre_header
                _
              $region38: #{_lambda_.9} parent=35 // loop_header
                %s147 = sphi 0, %s151
                %p148 = scmp.ge.s32.totalorder %s147, 1
                %s152 = sphi %s137, %s137
                %s153 = sphi %s132, %s132
              $region39: #{_lambda_.9} parent=35 // loop_header_branch
                %150 = sbr.rel (%p148) target = $region43
              $region40: #{_lambda_.9} parent=35 // loop_body
                %v154 = vld [vmem:[%s152] sm:%s145]
                %155 = vst [vmem:[%s153] sm:%s145] %v154
                %v156 = vld [vmem:[%s152 + $0x8] sm:%s145]
                %157 = vst [vmem:[%s153 + $0x4] sm:%s145] %v156
                %v158 = vld [vmem:[%s152 + $0x10] sm:%s145]
                %159 = vst [vmem:[%s153 + $0x8] sm:%s145] %v158
                %v160 = vld [vmem:[%s152 + $0x18] sm:%s145]
                %161 = vst [vmem:[%s153 + $0xc] sm:%s145] %v160
                %v162 = vld [vmem:[%s152 + $0x20] sm:%s145]
                %163 = vst [vmem:[%s153 + $0x10] sm:%s145] %v162
                %v164 = vld [vmem:[%s152 + $0x28] sm:%s145]
                %165 = vst [vmem:[%s153 + $0x14] sm:%s145] %v164
                %v166 = vld [vmem:[%s152 + $0x30] sm:%s145]
                %167 = vst [vmem:[%s153 + $0x18] sm:%s145] %v166
                %v168 = vld [vmem:[%s152 + $0x38] sm:%s145]
                %169 = vst [vmem:[%s153 + $0x1c] sm:%s145] %v168
                %v170 = vld [vmem:[%s152 + $0x40] sm:%s145]
                %171 = vst [vmem:[%s153 + $0x20] sm:%s145] %v170
                %v172 = vld [vmem:[%s152 + $0x48] sm:%s145]
                %173 = vst [vmem:[%s153 + $0x24] sm:%s145] %v172
                %v174 = vld [vmem:[%s152 + $0x50] sm:%s145]
                %175 = vst [vmem:[%s153 + $0x28] sm:%s145] %v174
                %v176 = vld [vmem:[%s152 + $0x58] sm:%s145]
                %177 = vst [vmem:[%s153 + $0x2c] sm:%s145] %v176
                %v178 = vld [vmem:[%s152 + $0x60] sm:%s145]
                %179 = vst [vmem:[%s153 + $0x30] sm:%s145] %v178
                %v180 = vld [vmem:[%s152 + $0x68] sm:%s145]
                %181 = vst [vmem:[%s153 + $0x34] sm:%s145] %v180
                %v182 = vld [vmem:[%s152 + $0x70] sm:%s145]
                %183 = vst [vmem:[%s153 + $0x38] sm:%s145] %v182
                %v184 = vld [vmem:[%s152 + $0x78] sm:%s145]
                %185 = vst [vmem:[%s153 + $0x3c] sm:%s145] %v184
              $region41: #{_lambda_.9} parent=35 // loop_footer
                %s151 = sadd.s32 1, %s147
              $region42: #{_lambda_.9} parent=35 // loop_footer_branch
                %146 = sbr.rel target = $region38
              $region43: #{_lambda_.9} parent=35 // loop_exit
                _
            $region36: #{_lambda_.9} parent=27 // pred_fallthru
              _
          $region28: #{_lambda_.9} parent=23 // pred_fallthru
            _
          %238 = vnop
        $region24: #{_lambda_.9} parent=19 // pred_fallthru
          _
      $region20: #{_lambda_.9} parent=5 // pred_fallthru
        _
      %p239 = scmp.le.s32.totalorder 1, %s8
      %p240 = scmp.lt.s32.totalorder %s8, 3
      %p241 = pnand %p239, %p240
      %p242 = pneg %p241
      // Predicated region
      $region62: #{_lambda_.9} parent=5 // pred_check
        _
      $region63: #{_lambda_.9} parent=5 // pred_check_branch
        %244 = sbr.rel (%p241) target = $region65
      $region64: #{_lambda_.9} parent=5 // pred_region
        %s245 = ssub.s32 %s8, 1
        %s246 = sand.u32 %s61, 1
        %s247 = sand.u32 %s61, 1
        %s248 = smul.addr %s247, 64
        %s249 = scalar_lea.vmem [#allocation3], %s248
        // Predicated region
        $region66: #{_lambda_.9} parent=64 // pred_check
          %p250 = pneg %p74
        $region67: #{_lambda_.9} parent=64 // pred_check_branch
          %252 = sbr.rel (%p250) target = $region69
        $region68: #{_lambda_.9} parent=64 // pred_region
          _
        $region69: #{_lambda_.9} parent=64 // pred_fallthru
          _
        %p253 = scmp.lt.s32.totalorder %s18, 0
        %s254 = scalar_select %p253, %s18, 0
        %s255 = smul.addr %s254, 4
        %s256 = scalar_lea.vmem %s0, %s255
        %p257 = pneg %p46
        %p258 = pneg %p43
        %s259 = sand.u32 %s61, 1
        %s260 = sand.u32 %s61, 1
        %s261 = smul.addr %s260, 64
        %s262 = scalar_lea.vmem [#allocation3], %s261
        %p263 = pneg %p74
        %p264 = pneg %p71
        %p265 = pneg %p100
        %p266 = pneg %p97
        %s267 = sand.u32 %s87, 1
        %s268 = sand.u32 %s87, 1
        %s269 = smul.addr %s268, 64
        %s270 = scalar_lea.vmem [#allocation4], %s269
        %p271 = scmp.lt.s32.totalorder %s18, 0
        %s272 = scalar_select %p271, %s18, 0
        %s273 = smul.addr %s272, 4
        %s274 = scalar_lea.vmem %s0, %s273
        %s275 = smul.u32 16, %s18
        %p276 = scmp.eq.s32.totalorder %s18, 0
        // Predicated region
        $region70: #{_lambda_.9} parent=64 // pred_check
          %p277 = pneg %p276
        $region71: #{_lambda_.9} parent=64 // pred_check_branch
          %279 = sbr.rel (%p277) target = $region73
        $region72: #{_lambda_.9} parent=64 // pred_region
          %280 = vst [vmem:[#allocation2] sm:$0xff] 0.0
          %281 = vst [vmem:[#allocation2 + $0x8] sm:$0xff] 0.0
          %282 = vst [vmem:[#allocation2 + $0x10] sm:$0xff] 0.0
          %283 = vst [vmem:[#allocation2 + $0x18] sm:$0xff] 0.0
          %284 = vst [vmem:[#allocation2 + $0x20] sm:$0xff] 0.0
          %285 = vst [vmem:[#allocation2 + $0x28] sm:$0xff] 0.0
          %286 = vst [vmem:[#allocation2 + $0x30] sm:$0xff] 0.0
          %287 = vst [vmem:[#allocation2 + $0x38] sm:$0xff] 0.0
        $region73: #{_lambda_.9} parent=64 // pred_fallthru
          _
        %v288 = vld [vmem:[#allocation2] sm:$0xff]
        %v289 = vld [vmem:[#allocation2 + $0x8] sm:$0xff]
        %v290 = vld [vmem:[#allocation2 + $0x10] sm:$0xff]
        %v291 = vld [vmem:[#allocation2 + $0x18] sm:$0xff]
        %v292 = vld [vmem:[#allocation2 + $0x20] sm:$0xff]
        %v293 = vld [vmem:[#allocation2 + $0x28] sm:$0xff]
        %v294 = vld [vmem:[#allocation2 + $0x30] sm:$0xff]
        %v295 = vld [vmem:[#allocation2 + $0x38] sm:$0xff]
        %v296 = vld [vmem:[%s274] sm:$0xf]
        %v297 = vld [vmem:[%s274 + $0x4] sm:$0xf]
        %v298 = vld [vmem:[%s274 + $0x8] sm:$0xf]
        %v299 = vld [vmem:[%s274 + $0xc] sm:$0xf]
        %v300 = vld [vmem:[%s274 + $0x10] sm:$0xf]
        %v301 = vld [vmem:[%s274 + $0x14] sm:$0xf]
        %v302 = vld [vmem:[%s274 + $0x18] sm:$0xf]
        %v303 = vld [vmem:[%s274 + $0x1c] sm:$0xf]
        %v304 = vld [vmem:[%s249] sm:$0xf]
        %v305 = vld [vmem:[%s249 + $0x4] sm:$0xf]
        %v306 = vld [vmem:[%s249 + $0x8] sm:$0xf]
        %v307 = vld [vmem:[%s249 + $0xc] sm:$0xf]
        %v308 = vld [vmem:[%s249 + $0x10] sm:$0xf]
        %v309 = vld [vmem:[%s249 + $0x14] sm:$0xf]
        %v310 = vld [vmem:[%s249 + $0x18] sm:$0xf]
        %v311 = vld [vmem:[%s249 + $0x1c] sm:$0xf]
        %v312 = vld [vmem:[%s249 + $0x20] sm:$0xf]
        %v313 = vld [vmem:[%s249 + $0x24] sm:$0xf]
        %v314 = vld [vmem:[%s249 + $0x28] sm:$0xf]
        %v315 = vld [vmem:[%s249 + $0x2c] sm:$0xf]
        %v316 = vld [vmem:[%s249 + $0x30] sm:$0xf]
        %v317 = vld [vmem:[%s249 + $0x34] sm:$0xf]
        %v318 = vld [vmem:[%s249 + $0x38] sm:$0xf]
        %v319 = vld [vmem:[%s249 + $0x3c] sm:$0xf]
        %v328 = vunpack.c.l.b16 %v296
        %v329 = vunpack.c.l.b16 %v297
        %v330 = vunpack.c.l.b16 %v298
        %v331 = vunpack.c.l.b16 %v299
        %v332 = vunpack.c.l.b16 %v300
        %v333 = vunpack.c.l.b16 %v301
        %v334 = vunpack.c.l.b16 %v302
        %v335 = vunpack.c.l.b16 %v303
        %v336 = vpack.c.b16 %v329, %v328
        %v337 = vpack.c.b16 %v331, %v330
        %v338 = vpack.c.b16 %v333, %v332
        %v339 = vpack.c.b16 %v335, %v334
        %v360 = vunpack.c.l.b16 %v304
        %v361 = vunpack.c.l.b16 %v305
        %v362 = vunpack.c.l.b16 %v306
        %v363 = vunpack.c.l.b16 %v307
        %v364 = vunpack.c.l.b16 %v308
        %v365 = vunpack.c.l.b16 %v309
        %v366 = vunpack.c.l.b16 %v310
        %v367 = vunpack.c.l.b16 %v311
        %v368 = vunpack.c.l.b16 %v312
        %v369 = vunpack.c.l.b16 %v313
        %v370 = vunpack.c.l.b16 %v314
        %v371 = vunpack.c.l.b16 %v315
        %v372 = vunpack.c.l.b16 %v316
        %v373 = vunpack.c.l.b16 %v317
        %v374 = vunpack.c.l.b16 %v318
        %v375 = vunpack.c.l.b16 %v319
        %v376 = vpack.c.b16 %v361, %v360
        %v377 = vpack.c.b16 %v363, %v362
        %v378 = vpack.c.b16 %v365, %v364
        %v379 = vpack.c.b16 %v367, %v366
        %v380 = vpack.c.b16 %v369, %v368
        %v381 = vpack.c.b16 %v371, %v370
        %v382 = vpack.c.b16 %v373, %v372
        %v383 = vpack.c.b16 %v375, %v374
        %392 = vmatpush.bf16.msra.mxu0 %v383
        %393 = vmatpush.bf16.msra.mxu0 %v382
        %394 = vmatpush.bf16.msra.mxu0 %v381
        %395 = vmatpush.bf16.msra.mxu0 %v380
        %396 = vmatpush.bf16.msra.mxu0 %v379
        %397 = vmatpush.bf16.msra.mxu0 %v378
        %398 = vmatpush.bf16.msra.mxu0 %v377
        %399 = vmatpush.bf16.msra.mxu0 %v376
        %400 = vmatmul.bf16.gmra.mxu0 %v336
        %v401 = vpop.f32.mrf.mxu0
        %v402 = vadd.f32 0.0, %v401
        %v403 = vpop.f32.mrf.mxu0
        %v404 = vadd.f32 0.0, %v403
        %405 = vmatmul.bf16.gmra.mxu0 %v337
        %v406 = vpop.f32.mrf.mxu0
        %v407 = vadd.f32 0.0, %v406
        %v408 = vpop.f32.mrf.mxu0
        %v409 = vadd.f32 0.0, %v408
        %410 = vmatmul.bf16.gmra.mxu0 %v338
        %v411 = vpop.f32.mrf.mxu0
        %v412 = vadd.f32 0.0, %v411
        %v413 = vpop.f32.mrf.mxu0
        %v414 = vadd.f32 0.0, %v413
        %415 = vmatmul.bf16.gmra.mxu0 %v339
        %v416 = vpop.f32.mrf.mxu0
        %v417 = vadd.f32 0.0, %v416
        %v418 = vpop.f32.mrf.mxu0
        %v419 = vadd.f32 0.0, %v418
        %420 = vdwg.mxu0
        %v421 = vadd.f32 %v288, %v402
        %v422 = vadd.f32 %v289, %v404
        %v423 = vadd.f32 %v290, %v407
        %v424 = vadd.f32 %v291, %v409
        %v425 = vadd.f32 %v292, %v412
        %v426 = vadd.f32 %v293, %v414
        %v427 = vadd.f32 %v294, %v417
        %v428 = vadd.f32 %v295, %v419
        %429 = vst [vmem:[#allocation2] sm:$0xff] %v421
        %430 = vst [vmem:[#allocation2 + $0x8] sm:$0xff] %v422
        %431 = vst [vmem:[#allocation2 + $0x10] sm:$0xff] %v423
        %432 = vst [vmem:[#allocation2 + $0x18] sm:$0xff] %v424
        %433 = vst [vmem:[#allocation2 + $0x20] sm:$0xff] %v425
        %434 = vst [vmem:[#allocation2 + $0x28] sm:$0xff] %v426
        %435 = vst [vmem:[#allocation2 + $0x30] sm:$0xff] %v427
        %436 = vst [vmem:[#allocation2 + $0x38] sm:$0xff] %v428
        // Predicated region
        $region74: #{_lambda_.9} parent=64 // pred_check
          %p437 = pneg %p276
        $region75: #{_lambda_.9} parent=64 // pred_check_branch
          %439 = sbr.rel (%p437) target = $region77
        $region76: #{_lambda_.9} parent=64 // pred_region
          %v440 = vld [vmem:[#allocation2] sm:$0xff]
          %v441 = vld [vmem:[#allocation2 + $0x8] sm:$0xff]
          %v442 = vld [vmem:[#allocation2 + $0x10] sm:$0xff]
          %v443 = vld [vmem:[#allocation2 + $0x18] sm:$0xff]
          %v444 = vld [vmem:[#allocation2 + $0x20] sm:$0xff]
          %v445 = vld [vmem:[#allocation2 + $0x28] sm:$0xff]
          %v446 = vld [vmem:[#allocation2 + $0x30] sm:$0xff]
          %v447 = vld [vmem:[#allocation2 + $0x38] sm:$0xff]
          %v448 = vtanh.pop %v440
          %v449 = vtanh.pop %v441
          %v450 = vtanh.pop %v442
          %v451 = vtanh.pop %v443
          %v452 = vtanh.pop %v444
          %v453 = vtanh.pop %v445
          %v454 = vtanh.pop %v446
          %v455 = vtanh.pop %v447
          %456 = vst [vmem:[%s270] sm:$0xff] %v448
          %457 = vst [vmem:[%s270 + $0x8] sm:$0xff] %v449
          %458 = vst [vmem:[%s270 + $0x10] sm:$0xff] %v450
          %459 = vst [vmem:[%s270 + $0x18] sm:$0xff] %v451
          %460 = vst [vmem:[%s270 + $0x20] sm:$0xff] %v452
          %461 = vst [vmem:[%s270 + $0x28] sm:$0xff] %v453
          %462 = vst [vmem:[%s270 + $0x30] sm:$0xff] %v454
          %463 = vst [vmem:[%s270 + $0x38] sm:$0xff] %v455
        $region77: #{_lambda_.9} parent=64 // pred_fallthru
          _
        %s464 = sand.u32 %s87, 1
        %s465 = sand.u32 %s87, 1
        %s466 = smul.addr %s465, 64
        %s467 = scalar_lea.vmem [#allocation4], %s466
        // Predicated region
        $region78: #{_lambda_.9} parent=64 // pred_check
          %p468 = pneg %p97
        $region79: #{_lambda_.9} parent=64 // pred_check_branch
          %470 = sbr.rel (%p468) target = $region81
        $region80: #{_lambda_.9} parent=64 // pred_region
          %s471 = smul.addr %s17, 8
          %s472 = scalar_lea.vmem %s2, %s471
          // Predicated region
          $region82: #{_lambda_.9} parent=80 // pred_check
            _
          $region83: #{_lambda_.9} parent=80 // pred_check_branch
            %474 = sbr.rel (0) target = $region85
          $region84: #{_lambda_.9} parent=80 // pred_region
            // Predicated region
            $region86: #{_lambda_.9} parent=84 // pred_check
              _
            $region87: #{_lambda_.9} parent=84 // pred_check_branch
              %476 = sbr.rel (0) target = $region89
            $region88: #{_lambda_.9} parent=84 // pred_region
              // Predicated region
              $region101: #{_lambda_.9} parent=88 // pred_check
                _
              $region102: #{_lambda_.9} parent=88 // pred_check_branch
                %506 = sbr.rel (0) target = $region104
              $region103: #{_lambda_.9} parent=88 // pred_region
                loop: start=0, step=1, limit=1
                $region105: #{_lambda_.9} parent=103 // loop_pre_header
                  _
                $region106: #{_lambda_.9} parent=103 // loop_header
                  %s508 = sphi 0, %s512
                  %p509 = scmp.ge.s32.totalorder %s508, 1
                  %s513 = sphi %s467, %s467
                  %s514 = sphi %s472, %s472
                $region107: #{_lambda_.9} parent=103 // loop_header_branch
                  %511 = sbr.rel (%p509) target = $region111
                $region108: #{_lambda_.9} parent=103 // loop_body
                  %v515 = vld [vmem:[%s513] sm:$0xff]
                  %516 = vst [vmem:[%s514] sm:$0xff] %v515
                  %v517 = vld [vmem:[%s513 + $0x8] sm:$0xff]
                  %518 = vst [vmem:[%s514 + $0x10] sm:$0xff] %v517
                  %v519 = vld [vmem:[%s513 + $0x10] sm:$0xff]
                  %520 = vst [vmem:[%s514 + $0x20] sm:$0xff] %v519
                  %v521 = vld [vmem:[%s513 + $0x18] sm:$0xff]
                  %522 = vst [vmem:[%s514 + $0x30] sm:$0xff] %v521
                  %v523 = vld [vmem:[%s513 + $0x20] sm:$0xff]
                  %524 = vst [vmem:[%s514 + $0x40] sm:$0xff] %v523
                  %v525 = vld [vmem:[%s513 + $0x28] sm:$0xff]
                  %526 = vst [vmem:[%s514 + $0x50] sm:$0xff] %v525
                  %v527 = vld [vmem:[%s513 + $0x30] sm:$0xff]
                  %528 = vst [vmem:[%s514 + $0x60] sm:$0xff] %v527
                  %v529 = vld [vmem:[%s513 + $0x38] sm:$0xff]
                  %530 = vst [vmem:[%s514 + $0x70] sm:$0xff] %v529
                $region109: #{_lambda_.9} parent=103 // loop_footer
                  %s512 = sadd.s32 1, %s508
                $region110: #{_lambda_.9} parent=103 // loop_footer_branch
                  %507 = sbr.rel target = $region106
                $region111: #{_lambda_.9} parent=103 // loop_exit
                  _
              $region104: #{_lambda_.9} parent=88 // pred_fallthru
                _
              // Predicated region
              $region112: #{_lambda_.9} parent=88 // pred_check
                _
              $region113: #{_lambda_.9} parent=88 // pred_check_branch
                %532 = sbr.rel target = $region115
              $region114: #{_lambda_.9} parent=88 // pred_region
                _
              $region115: #{_lambda_.9} parent=88 // pred_fallthru
                _
            $region89: #{_lambda_.9} parent=84 // pred_fallthru
              _
            // Predicated region
            $region90: #{_lambda_.9} parent=84 // pred_check
              _
            $region91: #{_lambda_.9} parent=84 // pred_check_branch
              %478 = sbr.rel target = $region93
            $region92: #{_lambda_.9} parent=84 // pred_region
              %s480 = ssub.s32 256, 1
              loop: start=0, step=1, limit=1
              $region94: #{_lambda_.9} parent=92 // loop_pre_header
                _
              $region95: #{_lambda_.9} parent=92 // loop_header
                %s482 = sphi 0, %s486
                %p483 = scmp.ge.s32.totalorder %s482, 1
                %s487 = sphi %s467, %s467
                %s488 = sphi %s472, %s472
              $region96: #{_lambda_.9} parent=92 // loop_header_branch
                %485 = sbr.rel (%p483) target = $region100
              $region97: #{_lambda_.9} parent=92 // loop_body
                %v489 = vld [vmem:[%s487] sm:%s480]
                %490 = vst [vmem:[%s488] sm:%s480] %v489
                %v491 = vld [vmem:[%s487 + $0x8] sm:%s480]
                %492 = vst [vmem:[%s488 + $0x10] sm:%s480] %v491
                %v493 = vld [vmem:[%s487 + $0x10] sm:%s480]
                %494 = vst [vmem:[%s488 + $0x20] sm:%s480] %v493
                %v495 = vld [vmem:[%s487 + $0x18] sm:%s480]
                %496 = vst [vmem:[%s488 + $0x30] sm:%s480] %v495
                %v497 = vld [vmem:[%s487 + $0x20] sm:%s480]
                %498 = vst [vmem:[%s488 + $0x40] sm:%s480] %v497
                %v499 = vld [vmem:[%s487 + $0x28] sm:%s480]
                %500 = vst [vmem:[%s488 + $0x50] sm:%s480] %v499
                %v501 = vld [vmem:[%s487 + $0x30] sm:%s480]
                %502 = vst [vmem:[%s488 + $0x60] sm:%s480] %v501
                %v503 = vld [vmem:[%s487 + $0x38] sm:%s480]
                %504 = vst [vmem:[%s488 + $0x70] sm:%s480] %v503
              $region98: #{_lambda_.9} parent=92 // loop_footer
                %s486 = sadd.s32 1, %s482
              $region99: #{_lambda_.9} parent=92 // loop_footer_branch
                %481 = sbr.rel target = $region95
              $region100: #{_lambda_.9} parent=92 // loop_exit
                _
            $region93: #{_lambda_.9} parent=84 // pred_fallthru
              _
          $region85: #{_lambda_.9} parent=80 // pred_fallthru
            _
          %533 = vnop
        $region81: #{_lambda_.9} parent=64 // pred_fallthru
          _
      $region65: #{_lambda_.9} parent=5 // pred_fallthru
        _
      %p534 = scmp.le.s32.totalorder 2, %s8
      // Predicated region
      $region116: #{_lambda_.9} parent=5 // pred_check
        %p535 = pneg %p534
      $region117: #{_lambda_.9} parent=5 // pred_check_branch
        %537 = sbr.rel (%p535) target = $region119
      $region118: #{_lambda_.9} parent=5 // pred_region
        %s538 = ssub.s32 %s8, 2
        // Predicated region
        $region120: #{_lambda_.9} parent=118 // pred_check
          %p539 = pneg %p103
        $region121: #{_lambda_.9} parent=118 // pred_check_branch
          %541 = sbr.rel (%p539) target = $region123
        $region122: #{_lambda_.9} parent=118 // pred_region
          %s542 = sand.u32 %s88, 1
          %s543 = sand.u32 %s88, 1
          %s544 = smul.addr %s543, 64
          %s545 = scalar_lea.vmem [#allocation4], %s544
        $region123: #{_lambda_.9} parent=118 // pred_fallthru
          _
      $region119: #{_lambda_.9} parent=5 // pred_fallthru
        _
    $region6: #{_lambda_.9} parent=1 // loop_footer
      %s12 = sadd.s32 1, %s8
    $region7: #{_lambda_.9} parent=1 // loop_footer_branch
      %7 = sbr.rel target = $region3
    $region8: #{_lambda_.9} parent=1 // loop_exit
      _

</llo_original>
